<compile_context>
chip_gen: v6e
topology: v6e:2x2x1
jax: 0.10.0
libtpu: 0.0.40
codegen_flags: <defaults>
</compile_context>

<pallas_src>
import functools

import jax
import jax.numpy as jnp
from jax import lax
from jax.experimental import pallas as pl
from jax.experimental.pallas import tpu as pltpu


# Well above the 16/32 MiB scoped default, below v7x's 64 MiB physical VMEM.
_VMEM_LIMIT_BYTES = 48 * 1024 * 1024

_GATE_PERM = (0, 1, 3, 2)   # PyTorch (i, f, g, o) -> kernel (i, f, o, g)


def _round_up(x, m):
    return ((x + m - 1) // m) * m


# ----------------------------------------------------------------------------
# Pallas kernels
# ----------------------------------------------------------------------------
def _bilstm_recurrence(x_ref, wih8_ref, whh_ref, b8_ref, y_ref, xp_scr,
                       *, seq_len, batch, hidden):
    """Fused bidirectional LSTM layer body; whole sequence resident in VMEM.

    Flat time-major layout, row index = t*batch + b.
      x_ref    : (T*Bp, in_dim)  f32
      wih8_ref : (in_dim, 8H)    bf16  [fwd 4H | bwd 4H], gate order (i,f,o,g)
      whh_ref  : (2, H, 4H)      bf16  stacked [fwd, bwd], gate order (i,f,o,g)
      b8_ref   : (1, 8H)         f32   fused b_ih + b_hh, [fwd | bwd]
      y_ref    : (T*Bp, 2H)      f32   [:, :H] fwd hidden, [:, H:] bwd hidden
      xp_scr   : (T*Bp, 8H)      f32   hoisted input projection (+ bias)
    """
    H = hidden

    # Hoisted, time-independent input projection: ONE (T*Bp, in_dim) @ (in_dim, 8H)
    # bf16 MXU matmul covering both directions, bias fused in, f32 accumulation.
    x_bf16 = x_ref[...].astype(jnp.bfloat16)
    xp_scr[...] = (jnp.dot(x_bf16, wih8_ref[...],
                           preferred_element_type=jnp.float32) + b8_ref[...])

    # Recurrent weights, (H, 4H) bf16 per direction.  For H beyond ~32 these live
    # in VMEM and are re-streamed into the MXU every step (see matmul_push_rhs TODO).
    whh_f = whh_ref[0]
    whh_b = whh_ref[1]

    def gates_to_state(gates, c_prev):
        # Gate order (i, f, o, g): one sigmoid over the leading 3H, tanh on the
        # trailing H only.
        sg = jax.nn.sigmoid(gates[:, : 3 * H])
        i_g = sg[:, 0 * H:1 * H]
        f_g = sg[:, 1 * H:2 * H]
        o_g = sg[:, 2 * H:3 * H]
        g_g = jnp.tanh(gates[:, 3 * H:4 * H])
        c_new = f_g * c_prev + i_g * g_g
        h_new = o_g * jnp.tanh(c_new)
        return h_new, c_new

    def step(t, carry):
        hf, cf, hb, cb = carry
        tb = seq_len - 1 - t
        rf = pl.ds(pl.multiple_of(t * batch, batch), batch)
        rb = pl.ds(pl.multiple_of(tb * batch, batch), batch)

        # Only the tiny (Bp, H) @ (H, 4H) recurrent matmuls stay on the serial path.
        gf = xp_scr[rf, 0:4 * H] + jnp.dot(
            hf.astype(jnp.bfloat16), whh_f, preferred_element_type=jnp.float32)
        gb = xp_scr[rb, 4 * H:8 * H] + jnp.dot(
            hb.astype(jnp.bfloat16), whh_b, preferred_element_type=jnp.float32)
        hf, cf = gates_to_state(gf, cf)
        hb, cb = gates_to_state(gb, cb)

        y_ref[rf, 0:H] = hf          # fwd hidden for time t
        y_ref[rb, H:2 * H] = hb      # bwd hidden for time tb
        return hf, cf, hb, cb

    zeros = jnp.zeros((batch, H), jnp.float32)
    # Full unroll for short sequences; cap the unroll for larger H so the
    # per-iteration live set (gf/gb/sg/h/c tiles) stays inside the 64-vreg file.
    unroll = seq_len if seq_len <= 16 else (8 if H <= 64 else 4)
    lax.fori_loop(0, seq_len, step, (zeros, zeros, zeros, zeros), unroll=unroll)


def bilstm_layer_kernel(x_ref, wih8_ref, whh_ref, b8_ref, y_ref, xp_scr,
                        *, seq_len, batch, hidden):
    """Intermediate layer: emits the (T*Bp, 2H) sequence output."""
    _bilstm_recurrence(x_ref, wih8_ref, whh_ref, b8_ref, y_ref, xp_scr,
                       seq_len=seq_len, batch=batch, hidden=hidden)


def bilstm_cls_kernel(x_ref, wih8_ref, whh_ref, b8_ref, wcls_ref, bcls_ref,
                      logits_ref, y_scr, xp_scr, *, seq_len, batch, hidden):
    """Last layer fused with the classifier: the sequence output stays in VMEM
    (never hits HBM); only lane-padded logits are written back."""
    _bilstm_recurrence(x_ref, wih8_ref, whh_ref, b8_ref, y_scr, xp_scr,
                       seq_len=seq_len, batch=batch, hidden=hidden)
    logits_ref[...] = (
        jnp.dot(y_scr[...].astype(jnp.bfloat16), wcls_ref[...],
                preferred_element_type=jnp.float32) + bcls_ref[...])


# ----------------------------------------------------------------------------
# Wrappers
# ----------------------------------------------------------------------------
def run_bilstm_layer(x2d, layer, *, seq_len, batch, cls=None):
    """x2d: (T*Bp, in_dim) f32.  Returns (T*Bp, 2H) f32 sequence output, or
    (T*Bp, Lp) f32 logits when `cls` is given (classifier fused into this call)."""
    N, _ = x2d.shape
    H = layer["whh_t"].shape[1]
    cp = pltpu.CompilerParams(vmem_limit_bytes=_VMEM_LIMIT_BYTES)

    if cls is None:
        kernel = functools.partial(bilstm_layer_kernel,
                                   seq_len=seq_len, batch=batch, hidden=H)
        return pl.pallas_call(
            kernel,
            out_shape=jax.ShapeDtypeStruct((N, 2 * H), jnp.float32),
            scratch_shapes=[pltpu.VMEM((N, 8 * H), jnp.float32)],   # fused xp
            compiler_params=cp,
        )(x2d, layer["wih8_t"], layer["whh_t"], layer["b8"])

    Lp = cls["w_t_pad"].shape[1]
    kernel = functools.partial(bilstm_cls_kernel,
                               seq_len=seq_len, batch=batch, hidden=H)
    return pl.pallas_call(
        kernel,
        out_shape=jax.ShapeDtypeStruct((N, Lp), jnp.float32),
        scratch_shapes=[pltpu.VMEM((N, 2 * H), jnp.float32),   # VMEM-resident y
                        pltpu.VMEM((N, 8 * H), jnp.float32)],  # fused xp
        compiler_params=cp,
    )(x2d, layer["wih8_t"], layer["whh_t"], layer["b8"],
      cls["w_t_pad"], cls["b_pad"])


def state_tracking_forward(inputs, params):
    """inputs: (B, T, E) f32 (batch_first). Returns logits (B, T, num_labels)."""
    B, T, E = inputs.shape
    Bp = max(8, _round_up(B, 8))              # sublane-aligned batch

    # One small transpose + pad at the top; everything downstream stays in a flat
    # time-major (T*Bp, feature) layout (no per-layer transposes / concats).
    x = jnp.transpose(inputs, (1, 0, 2))      # (T, B, E)
    if Bp != B:
        x = jnp.pad(x, ((0, 0), (0, Bp - B), (0, 0)))
    x2d = x.reshape(T * Bp, E)

    n_layers = len(params["lstm"])
    for li, layer in enumerate(params["lstm"]):
        is_last = li == n_layers - 1
        x2d = run_bilstm_layer(x2d, layer, seq_len=T, batch=Bp,
                               cls=params["cls"] if is_last else None)

    L = params["cls"]["num_labels"]
    logits = x2d[:, :L].reshape(T, Bp, L)[:, :B, :]   # drop label / batch padding
    return jnp.transpose(logits, (1, 0, 2))           # (B, T, L)


# ----------------------------------------------------------------------------
# Deterministic parameter init (PyTorch-style U(-1/sqrt(H), 1/sqrt(H)))
# ----------------------------------------------------------------------------
def init_params(key, embedding_dims, n_layers, num_labels):
    H = embedding_dims
    k = 1.0 / jnp.sqrt(H)
    params = {"lstm": [], "cls": {}}

    def unif(key, shape, bound):
        return jax.random.uniform(key, shape, jnp.float32, -bound, bound)

    def perm_gates(w):
        # Leading dim 4H grouped per gate in PyTorch order (i,f,g,o) -> (i,f,o,g).
        return jnp.concatenate([w[g * H:(g + 1) * H] for g in _GATE_PERM], axis=0)

    for layer in range(n_layers):
        in_dim = H if layer == 0 else 2 * H
        wih_r, whh_r, b_r = [], [], []
        wih_k, whh_k, b_k = [], [], []
        for _ in range(2):                    # fwd, bwd
            key, k1, k2, k3, k4 = jax.random.split(key, 5)
            wih = unif(k1, (4 * H, in_dim), k)   # PyTorch weight_ih
            whh = unif(k2, (4 * H, H), k)        # PyTorch weight_hh
            bih = unif(k3, (4 * H,), k)
            bhh = unif(k4, (4 * H,), k)
            # Reference copies (PyTorch gate order, f32).
            wih_r.append(wih.T)                           # (in_dim, 4H)
            whh_r.append(whh.T)                           # (H, 4H)
            b_r.append((bih + bhh).reshape(1, 4 * H))
            # Kernel copies: gate-permuted, transposed, bf16 matmul operands.
            wih_k.append(perm_gates(wih).T)               # (in_dim, 4H)
            whh_k.append(perm_gates(whh).T)               # (H, 4H)
            b_k.append(perm_gates(bih + bhh))             # (4H,)
        params["lstm"].append({
            "wih8_t": jnp.concatenate(wih_k, axis=1).astype(jnp.bfloat16),  # (in,8H)
            "whh_t": jnp.stack(whh_k).astype(jnp.bfloat16),                 # (2,H,4H)
            "b8": jnp.concatenate(b_k).reshape(1, 8 * H),                   # (1,8H) f32
            "ref": {"wih_t": jnp.stack(wih_r), "whh_t": jnp.stack(whh_r),
                    "b": jnp.stack(b_r)},
        })

    key, k1, k2 = jax.random.split(key, 3)
    kc = 1.0 / jnp.sqrt(2 * H)
    w = jax.random.uniform(k1, (num_labels, 2 * H), jnp.float32, -kc, kc)
    b = jax.random.uniform(k2, (num_labels,), jnp.float32, -kc, kc)
    Lp = _round_up(num_labels, 128)           # lane-dense padded label dim
    w_t = w.T                                 # (2H, L)
    params["cls"] = {
        "num_labels": num_labels,
        "w_t_pad": jnp.pad(w_t, ((0, 0), (0, Lp - num_labels))).astype(jnp.bfloat16),
        "b_pad": jnp.pad(b.reshape(1, -1), ((0, 0), (0, Lp - num_labels))),
        "ref": {"w_t": w_t, "b": b.reshape(1, num_labels)},
    }
    return params


# ----------------------------------------------------------------------------
# Pure-JAX references (for correctness checks)
# ----------------------------------------------------------------------------
def ref_lstm_direction(x_tm, wih_t, whh_t, b, reverse, *, bf16_ops):
    T, B, in_dim = x_tm.shape
    H = whh_t.shape[0]
    xs = jnp.flip(x_tm, axis=0) if reverse else x_tm
    x2d = xs.reshape(T * B, in_dim)
    if bf16_ops:
        xp = jnp.dot(x2d.astype(jnp.bfloat16), wih_t.astype(jnp.bfloat16),
                     preferred_element_type=jnp.float32) + b
        whh_use = whh_t.astype(jnp.bfloat16)
    else:
        xp = jnp.dot(x2d, wih_t) + b
        whh_use = whh_t
    xp = xp.reshape(T, B, 4 * H)

    def cell(carry, xp_t):
        h, c = carry
        if bf16_ops:
            rec = jnp.dot(h.astype(jnp.bfloat16), whh_use,
                          preferred_element_type=jnp.float32)
        else:
            rec = h @ whh_use
        gates = xp_t + rec
        i = jax.nn.sigmoid(gates[:, :H])
        f = jax.nn.sigmoid(gates[:, H:2 * H])
        g = jnp.tanh(gates[:, 2 * H:3 * H])
        o = jax.nn.sigmoid(gates[:, 3 * H:])
        c = f * c + i * g
        h = o * jnp.tanh(c)
        return (h, c), h

    init = (jnp.zeros((B, H), jnp.float32), jnp.zeros((B, H), jnp.float32))
    _, ys = lax.scan(cell, init, xp)
    return jnp.flip(ys, axis=0) if reverse else ys


def ref_forward(inputs, params, *, bf16_ops=False):
    x_tm = jnp.transpose(inputs, (1, 0, 2))
    for layer in params["lstm"]:
        r = layer["ref"]
        yf = ref_lstm_direction(x_tm, r["wih_t"][0], r["whh_t"][0], r["b"][0],
                                False, bf16_ops=bf16_ops)
        yb = ref_lstm_direction(x_tm, r["wih_t"][1], r["whh_t"][1], r["b"][1],
                                True, bf16_ops=bf16_ops)
        x_tm = jnp.concatenate([yf, yb], axis=-1)
    seq_out = jnp.transpose(x_tm, (1, 0, 2))
    B, T, D = seq_out.shape
    c = params["cls"]["ref"]
    flat = seq_out.reshape(B * T, D)
    if bf16_ops:
        logits = jnp.dot(flat.astype(jnp.bfloat16), c["w_t"].astype(jnp.bfloat16),
                         preferred_element_type=jnp.float32) + c["b"]
    else:
        logits = flat @ c["w_t"] + c["b"]
    return logits.reshape(B, T, -1)


# ----------------------------------------------------------------------------
if __name__ == "__main__":
    embedding_dims = 32
    n_layers = 2
    num_labels = 5
    B, T = 2, 8

    key = jax.random.PRNGKey(0)
    key, pkey, xkey = jax.random.split(key, 3)
    params = init_params(pkey, embedding_dims, n_layers, num_labels)
    inputs = jax.random.normal(xkey, (B, T, embedding_dims), jnp.float32)

    logits = state_tracking_forward(inputs, params)
    logits = jax.block_until_ready(logits)
    assert logits.shape == (B, T, num_labels), logits.shape

    # Tight check vs a pure-JAX reference using the same bf16 matmul operands
    # (validates kernel math incl. gate permutation, bidir fusion, classifier).
    exp_bf16 = ref_forward(inputs, params, bf16_ops=True)
    err_bf16 = float(jnp.max(jnp.abs(logits - exp_bf16)))
    assert jnp.allclose(logits, exp_bf16, atol=2e-3, rtol=2e-3), err_bf16

    # Loose check vs the full-f32 reference (bounds the bf16 operand drift).
    exp_f32 = ref_forward(inputs, params, bf16_ops=False)
    err_f32 = float(jnp.max(jnp.abs(logits - exp_f32)))
    assert jnp.allclose(logits, exp_f32, atol=8e-2, rtol=5e-2), err_f32

    print("KERNEL_OK")
</pallas_src>

<mosaic_0001>
module attributes {stable_mosaic.version = 11 : i64} {
  func.func @bilstm_layer_kernel(%arg0: memref<64x32xf32, #tpu.memory_space<vmem>>, %arg1: memref<32x256xbf16, #tpu.memory_space<vmem>>, %arg2: memref<2x32x128xbf16, #tpu.memory_space<vmem>>, %arg3: memref<1x256xf32, #tpu.memory_space<vmem>>, %arg4: memref<64x64xf32, #tpu.memory_space<vmem>>, %arg5: memref<64x256xf32, #tpu.memory_space<vmem>>) attributes {dimension_semantics = [], scalar_prefetch = 0 : i64, scratch_operands = 1 : i64, tpu.core_type = #tpu.core_type<tc>} {
    %c0 = arith.constant 0 : index
    %c0_0 = arith.constant 0 : index
    %0 = vector.load %arg0[%c0, %c0_0] : memref<64x32xf32, #tpu.memory_space<vmem>>, vector<64x32xf32>
    %1 = arith.truncf %0 : vector<64x32xf32> to vector<64x32xbf16>
    %c0_1 = arith.constant 0 : index
    %c0_2 = arith.constant 0 : index
    %2 = vector.load %arg1[%c0_1, %c0_2] : memref<32x256xbf16, #tpu.memory_space<vmem>>, vector<32x256xbf16>
    %cst = arith.constant dense<0.000000e+00> : vector<64x256xf32>
    %3 = tpu.matmul %1, %2, %cst {dimension_numbers = #tpu.dot_dimension_numbers<[1], [0], [0], [1], [0, 0, 1, 1], [], []>} : vector<64x32xbf16>, vector<32x256xbf16>, vector<64x256xf32> -> vector<64x256xf32>
    %c0_3 = arith.constant 0 : index
    %c0_4 = arith.constant 0 : index
    %4 = vector.load %arg3[%c0_3, %c0_4] : memref<1x256xf32, #tpu.memory_space<vmem>>, vector<1x256xf32>
    %5 = vector.broadcast %4 : vector<1x256xf32> to vector<64x256xf32>
    %6 = arith.addf %3, %5 : vector<64x256xf32>
    %c0_5 = arith.constant 0 : index
    %c0_6 = arith.constant 0 : index
    %7 = vector.load %arg5[%c0_5, %c0_6] : memref<64x256xf32, #tpu.memory_space<vmem>>, vector<64x256xf32>
    tpu.vector_store %arg5[%c0_5, %c0_6], %6 {strides = array<i32>} : memref<64x256xf32, #tpu.memory_space<vmem>>, vector<64x256xf32>,
    %c0_7 = arith.constant 0 : index
    %c0_8 = arith.constant 0 : index
    %c0_9 = arith.constant 0 : index
    %8 = vector.load %arg2[%c0_7, %c0_8, %c0_9] : memref<2x32x128xbf16, #tpu.memory_space<vmem>>, vector<1x32x128xbf16>
    %9 = vector.shape_cast %8 : vector<1x32x128xbf16> to vector<32x128xbf16>
    %c1 = arith.constant 1 : index
    %c0_10 = arith.constant 0 : index
    %c0_11 = arith.constant 0 : index
    %10 = vector.load %arg2[%c1, %c0_10, %c0_11] : memref<2x32x128xbf16, #tpu.memory_space<vmem>>, vector<1x32x128xbf16>
    %11 = vector.shape_cast %10 : vector<1x32x128xbf16> to vector<32x128xbf16>
    %cst_12 = arith.constant 0.000000e+00 : f32
    %12 = vector.broadcast %cst_12 : f32 to vector<8x32xf32>
    %c0_i32 = arith.constant 0 : i32
    %c7_i32 = arith.constant 7 : i32
    %13 = arith.subi %c7_i32, %c0_i32 : i32
    %c8_i32 = arith.constant 8 : i32
    %14 = arith.muli %c0_i32, %c8_i32 : i32
    %15 = tpu.assume_multiple %14, 8 : i32
    %c8_i32_13 = arith.constant 8 : i32
    %16 = arith.muli %13, %c8_i32_13 : i32
    %17 = tpu.assume_multiple %16, 8 : i32
    %18 = arith.index_cast %15 : i32 to index
    %c0_14 = arith.constant 0 : index
    %19 = vector.load %arg5[%18, %c0_14] : memref<64x256xf32, #tpu.memory_space<vmem>>, vector<8x128xf32>
    %20 = arith.truncf %12 : vector<8x32xf32> to vector<8x32xbf16>
    %cst_15 = arith.constant dense<0.000000e+00> : vector<8x128xf32>
    %21 = tpu.matmul %20, %9, %cst_15 {dimension_numbers = #tpu.dot_dimension_numbers<[1], [0], [0], [1], [0, 0, 1, 1], [], []>} : vector<8x32xbf16>, vector<32x128xbf16>, vector<8x128xf32> -> vector<8x128xf32>
    %22 = arith.addf %19, %21 : vector<8x128xf32>
    %23 = arith.index_cast %17 : i32 to index
    %c128 = arith.constant 128 : index
    %24 = vector.load %arg5[%23, %c128] : memref<64x256xf32, #tpu.memory_space<vmem>>, vector<8x128xf32>
    %25 = arith.truncf %12 : vector<8x32xf32> to vector<8x32xbf16>
    %cst_16 = arith.constant dense<0.000000e+00> : vector<8x128xf32>
    %26 = tpu.matmul %25, %11, %cst_16 {dimension_numbers = #tpu.dot_dimension_numbers<[1], [0], [0], [1], [0, 0, 1, 1], [], []>} : vector<8x32xbf16>, vector<32x128xbf16>, vector<8x128xf32> -> vector<8x128xf32>
    %27 = arith.addf %24, %26 : vector<8x128xf32>
    %28 = vector.extract_strided_slice %22 {offsets = [0, 0], sizes = [8, 96], strides = [1, 1]} : vector<8x128xf32> to vector<8x96xf32>
    %29 = arith.negf %28 : vector<8x96xf32>
    %30 = math.exp %29 : vector<8x96xf32>
    %cst_17 = arith.constant 1.000000e+00 : f32
    %31 = vector.broadcast %cst_17 : f32 to vector<8x96xf32>
    %32 = arith.addf %31, %30 : vector<8x96xf32>
    %33 = arith.divf %31, %32 : vector<8x96xf32>
    %34 = vector.extract_strided_slice %33 {offsets = [0, 0], sizes = [8, 32], strides = [1, 1]} : vector<8x96xf32> to vector<8x32xf32>
    %35 = vector.extract_strided_slice %33 {offsets = [0, 32], sizes = [8, 32], strides = [1, 1]} : vector<8x96xf32> to vector<8x32xf32>
    %36 = vector.extract_strided_slice %33 {offsets = [0, 64], sizes = [8, 32], strides = [1, 1]} : vector<8x96xf32> to vector<8x32xf32>
    %37 = vector.extract_strided_slice %22 {offsets = [0, 96], sizes = [8, 32], strides = [1, 1]} : vector<8x128xf32> to vector<8x32xf32>
    %38 = math.tanh %37 : vector<8x32xf32>
    %39 = arith.mulf %35, %12 : vector<8x32xf32>
    %40 = arith.mulf %34, %38 : vector<8x32xf32>
    %41 = arith.addf %39, %40 : vector<8x32xf32>
    %42 = math.tanh %41 : vector<8x32xf32>
    %43 = arith.mulf %36, %42 : vector<8x32xf32>
    %44 = vector.extract_strided_slice %27 {offsets = [0, 0], sizes = [8, 96], strides = [1, 1]} : vector<8x128xf32> to vector<8x96xf32>
    %45 = arith.negf %44 : vector<8x96xf32>
    %46 = math.exp %45 : vector<8x96xf32>
    %cst_18 = arith.constant 1.000000e+00 : f32
    %47 = vector.broadcast %cst_18 : f32 to vector<8x96xf32>
    %48 = arith.addf %47, %46 : vector<8x96xf32>
    %49 = arith.divf %47, %48 : vector<8x96xf32>
    %50 = vector.extract_strided_slice %49 {offsets = [0, 0], sizes = [8, 32], strides = [1, 1]} : vector<8x96xf32> to vector<8x32xf32>
    %51 = vector.extract_strided_slice %49 {offsets = [0, 32], sizes = [8, 32], strides = [1, 1]} : vector<8x96xf32> to vector<8x32xf32>
    %52 = vector.extract_strided_slice %49 {offsets = [0, 64], sizes = [8, 32], strides = [1, 1]} : vector<8x96xf32> to vector<8x32xf32>
    %53 = vector.extract_strided_slice %27 {offsets = [0, 96], sizes = [8, 32], strides = [1, 1]} : vector<8x128xf32> to vector<8x32xf32>
    %54 = math.tanh %53 : vector<8x32xf32>
    %55 = arith.mulf %51, %12 : vector<8x32xf32>
    %56 = arith.mulf %50, %54 : vector<8x32xf32>
    %57 = arith.addf %55, %56 : vector<8x32xf32>
    %58 = math.tanh %57 : vector<8x32xf32>
    %59 = arith.mulf %52, %58 : vector<8x32xf32>
    %60 = arith.index_cast %15 : i32 to index
    %c0_19 = arith.constant 0 : index
    %61 = vector.load %arg4[%60, %c0_19] : memref<64x64xf32, #tpu.memory_space<vmem>>, vector<8x32xf32>
    tpu.vector_store %arg4[%60, %c0_19], %43 {strides = array<i32>} : memref<64x64xf32, #tpu.memory_space<vmem>>, vector<8x32xf32>,
    %62 = arith.index_cast %17 : i32 to index
    %c32 = arith.constant 32 : index
    %63 = vector.load %arg4[%62, %c32] : memref<64x64xf32, #tpu.memory_space<vmem>>, vector<8x32xf32>
    tpu.vector_store %arg4[%62, %c32], %59 {strides = array<i32>} : memref<64x64xf32, #tpu.memory_space<vmem>>, vector<8x32xf32>,
    %c1_i32 = arith.constant 1 : i32
    %c7_i32_20 = arith.constant 7 : i32
    %64 = arith.subi %c7_i32_20, %c1_i32 : i32
    %c8_i32_21 = arith.constant 8 : i32
    %65 = arith.muli %c1_i32, %c8_i32_21 : i32
    %66 = tpu.assume_multiple %65, 8 : i32
    %c8_i32_22 = arith.constant 8 : i32
    %67 = arith.muli %64, %c8_i32_22 : i32
    %68 = tpu.assume_multiple %67, 8 : i32
    %69 = arith.index_cast %66 : i32 to index
    %c0_23 = arith.constant 0 : index
    %70 = vector.load %arg5[%69, %c0_23] : memref<64x256xf32, #tpu.memory_space<vmem>>, vector<8x128xf32>
    %71 = arith.truncf %43 : vector<8x32xf32> to vector<8x32xbf16>
    %cst_24 = arith.constant dense<0.000000e+00> : vector<8x128xf32>
    %72 = tpu.matmul %71, %9, %cst_24 {dimension_numbers = #tpu.dot_dimension_numbers<[1], [0], [0], [1], [0, 0, 1, 1], [], []>} : vector<8x32xbf16>, vector<32x128xbf16>, vector<8x128xf32> -> vector<8x128xf32>
    %73 = arith.addf %70, %72 : vector<8x128xf32>
    %74 = arith.index_cast %68 : i32 to index
    %c128_25 = arith.constant 128 : index
    %75 = vector.load %arg5[%74, %c128_25] : memref<64x256xf32, #tpu.memory_space<vmem>>, vector<8x128xf32>
    %76 = arith.truncf %59 : vector<8x32xf32> to vector<8x32xbf16>
    %cst_26 = arith.constant dense<0.000000e+00> : vector<8x128xf32>
    %77 = tpu.matmul %76, %11, %cst_26 {dimension_numbers = #tpu.dot_dimension_numbers<[1], [0], [0], [1], [0, 0, 1, 1], [], []>} : vector<8x32xbf16>, vector<32x128xbf16>, vector<8x128xf32> -> vector<8x128xf32>
    %78 = arith.addf %75, %77 : vector<8x128xf32>
    %79 = vector.extract_strided_slice %73 {offsets = [0, 0], sizes = [8, 96], strides = [1, 1]} : vector<8x128xf32> to vector<8x96xf32>
    %80 = arith.negf %79 : vector<8x96xf32>
    %81 = math.exp %80 : vector<8x96xf32>
    %cst_27 = arith.constant 1.000000e+00 : f32
    %82 = vector.broadcast %cst_27 : f32 to vector<8x96xf32>
    %83 = arith.addf %82, %81 : vector<8x96xf32>
    %84 = arith.divf %82, %83 : vector<8x96xf32>
    %85 = vector.extract_strided_slice %84 {offsets = [0, 0], sizes = [8, 32], strides = [1, 1]} : vector<8x96xf32> to vector<8x32xf32>
    %86 = vector.extract_strided_slice %84 {offsets = [0, 32], sizes = [8, 32], strides = [1, 1]} : vector<8x96xf32> to vector<8x32xf32>
    %87 = vector.extract_strided_slice %84 {offsets = [0, 64], sizes = [8, 32], strides = [1, 1]} : vector<8x96xf32> to vector<8x32xf32>
    %88 = vector.extract_strided_slice %73 {offsets = [0, 96], sizes = [8, 32], strides = [1, 1]} : vector<8x128xf32> to vector<8x32xf32>
    %89 = math.tanh %88 : vector<8x32xf32>
    %90 = arith.mulf %86, %41 : vector<8x32xf32>
    %91 = arith.mulf %85, %89 : vector<8x32xf32>
    %92 = arith.addf %90, %91 : vector<8x32xf32>
    %93 = math.tanh %92 : vector<8x32xf32>
    %94 = arith.mulf %87, %93 : vector<8x32xf32>
    %95 = vector.extract_strided_slice %78 {offsets = [0, 0], sizes = [8, 96], strides = [1, 1]} : vector<8x128xf32> to vector<8x96xf32>
    %96 = arith.negf %95 : vector<8x96xf32>
    %97 = math.exp %96 : vector<8x96xf32>
    %cst_28 = arith.constant 1.000000e+00 : f32
    %98 = vector.broadcast %cst_28 : f32 to vector<8x96xf32>
    %99 = arith.addf %98, %97 : vector<8x96xf32>
    %100 = arith.divf %98, %99 : vector<8x96xf32>
    %101 = vector.extract_strided_slice %100 {offsets = [0, 0], sizes = [8, 32], strides = [1, 1]} : vector<8x96xf32> to vector<8x32xf32>
    %102 = vector.extract_strided_slice %100 {offsets = [0, 32], sizes = [8, 32], strides = [1, 1]} : vector<8x96xf32> to vector<8x32xf32>
    %103 = vector.extract_strided_slice %100 {offsets = [0, 64], sizes = [8, 32], strides = [1, 1]} : vector<8x96xf32> to vector<8x32xf32>
    %104 = vector.extract_strided_slice %78 {offsets = [0, 96], sizes = [8, 32], strides = [1, 1]} : vector<8x128xf32> to vector<8x32xf32>
    %105 = math.tanh %104 : vector<8x32xf32>
    %106 = arith.mulf %102, %57 : vector<8x32xf32>
    %107 = arith.mulf %101, %105 : vector<8x32xf32>
    %108 = arith.addf %106, %107 : vector<8x32xf32>
    %109 = math.tanh %108 : vector<8x32xf32>
    %110 = arith.mulf %103, %109 : vector<8x32xf32>
    %111 = arith.index_cast %66 : i32 to index
    %c0_29 = arith.constant 0 : index
    %112 = vector.load %arg4[%111, %c0_29] : memref<64x64xf32, #tpu.memory_space<vmem>>, vector<8x32xf32>
    tpu.vector_store %arg4[%111, %c0_29], %94 {strides = array<i32>} : memref<64x64xf32, #tpu.memory_space<vmem>>, vector<8x32xf32>,
    %113 = arith.index_cast %68 : i32 to index
    %c32_30 = arith.constant 32 : index
    %114 = vector.load %arg4[%113, %c32_30] : memref<64x64xf32, #tpu.memory_space<vmem>>, vector<8x32xf32>
    tpu.vector_store %arg4[%113, %c32_30], %110 {strides = array<i32>} : memref<64x64xf32, #tpu.memory_space<vmem>>, vector<8x32xf32>,
    %c2_i32 = arith.constant 2 : i32
    %c7_i32_31 = arith.constant 7 : i32
    %115 = arith.subi %c7_i32_31, %c2_i32 : i32
    %c8_i32_32 = arith.constant 8 : i32
    %116 = arith.muli %c2_i32, %c8_i32_32 : i32
    %117 = tpu.assume_multiple %116, 8 : i32
    %c8_i32_33 = arith.constant 8 : i32
    %118 = arith.muli %115, %c8_i32_33 : i32
    %119 = tpu.assume_multiple %118, 8 : i32
    %120 = arith.index_cast %117 : i32 to index
    %c0_34 = arith.constant 0 : index
    %121 = vector.load %arg5[%120, %c0_34] : memref<64x256xf32, #tpu.memory_space<vmem>>, vector<8x128xf32>
    %122 = arith.truncf %94 : vector<8x32xf32> to vector<8x32xbf16>
    %cst_35 = arith.constant dense<0.000000e+00> : vector<8x128xf32>
    %123 = tpu.matmul %122, %9, %cst_35 {dimension_numbers = #tpu.dot_dimension_numbers<[1], [0], [0], [1], [0, 0, 1, 1], [], []>} : vector<8x32xbf16>, vector<32x128xbf16>, vector<8x128xf32> -> vector<8x128xf32>
    %124 = arith.addf %121, %123 : vector<8x128xf32>
    %125 = arith.index_cast %119 : i32 to index
    %c128_36 = arith.constant 128 : index
    %126 = vector.load %arg5[%125, %c128_36] : memref<64x256xf32, #tpu.memory_space<vmem>>, vector<8x128xf32>
    %127 = arith.truncf %110 : vector<8x32xf32> to vector<8x32xbf16>
    %cst_37 = arith.constant dense<0.000000e+00> : vector<8x128xf32>
    %128 = tpu.matmul %127, %11, %cst_37 {dimension_numbers = #tpu.dot_dimension_numbers<[1], [0], [0], [1], [0, 0, 1, 1], [], []>} : vector<8x32xbf16>, vector<32x128xbf16>, vector<8x128xf32> -> vector<8x128xf32>
    %129 = arith.addf %126, %128 : vector<8x128xf32>
    %130 = vector.extract_strided_slice %124 {offsets = [0, 0], sizes = [8, 96], strides = [1, 1]} : vector<8x128xf32> to vector<8x96xf32>
    %131 = arith.negf %130 : vector<8x96xf32>
    %132 = math.exp %131 : vector<8x96xf32>
    %cst_38 = arith.constant 1.000000e+00 : f32
    %133 = vector.broadcast %cst_38 : f32 to vector<8x96xf32>
    %134 = arith.addf %133, %132 : vector<8x96xf32>
    %135 = arith.divf %133, %134 : vector<8x96xf32>
    %136 = vector.extract_strided_slice %135 {offsets = [0, 0], sizes = [8, 32], strides = [1, 1]} : vector<8x96xf32> to vector<8x32xf32>
    %137 = vector.extract_strided_slice %135 {offsets = [0, 32], sizes = [8, 32], strides = [1, 1]} : vector<8x96xf32> to vector<8x32xf32>
    %138 = vector.extract_strided_slice %135 {offsets = [0, 64], sizes = [8, 32], strides = [1, 1]} : vector<8x96xf32> to vector<8x32xf32>
    %139 = vector.extract_strided_slice %124 {offsets = [0, 96], sizes = [8, 32], strides = [1, 1]} : vector<8x128xf32> to vector<8x32xf32>
    %140 = math.tanh %139 : vector<8x32xf32>
    %141 = arith.mulf %137, %92 : vector<8x32xf32>
    %142 = arith.mulf %136, %140 : vector<8x32xf32>
    %143 = arith.addf %141, %142 : vector<8x32xf32>
    %144 = math.tanh %143 : vector<8x32xf32>
    %145 = arith.mulf %138, %144 : vector<8x32xf32>
    %146 = vector.extract_strided_slice %129 {offsets = [0, 0], sizes = [8, 96], strides = [1, 1]} : vector<8x128xf32> to vector<8x96xf32>
    %147 = arith.negf %146 : vector<8x96xf32>
    %148 = math.exp %147 : vector<8x96xf32>
    %cst_39 = arith.constant 1.000000e+00 : f32
    %149 = vector.broadcast %cst_39 : f32 to vector<8x96xf32>
    %150 = arith.addf %149, %148 : vector<8x96xf32>
    %151 = arith.divf %149, %150 : vector<8x96xf32>
    %152 = vector.extract_strided_slice %151 {offsets = [0, 0], sizes = [8, 32], strides = [1, 1]} : vector<8x96xf32> to vector<8x32xf32>
    %153 = vector.extract_strided_slice %151 {offsets = [0, 32], sizes = [8, 32], strides = [1, 1]} : vector<8x96xf32> to vector<8x32xf32>
    %154 = vector.extract_strided_slice %151 {offsets = [0, 64], sizes = [8, 32], strides = [1, 1]} : vector<8x96xf32> to vector<8x32xf32>
    %155 = vector.extract_strided_slice %129 {offsets = [0, 96], sizes = [8, 32], strides = [1, 1]} : vector<8x128xf32> to vector<8x32xf32>
    %156 = math.tanh %155 : vector<8x32xf32>
    %157 = arith.mulf %153, %108 : vector<8x32xf32>
    %158 = arith.mulf %152, %156 : vector<8x32xf32>
    %159 = arith.addf %157, %158 : vector<8x32xf32>
    %160 = math.tanh %159 : vector<8x32xf32>
    %161 = arith.mulf %154, %160 : vector<8x32xf32>
    %162 = arith.index_cast %117 : i32 to index
    %c0_40 = arith.constant 0 : index
    %163 = vector.load %arg4[%162, %c0_40] : memref<64x64xf32, #tpu.memory_space<vmem>>, vector<8x32xf32>
    tpu.vector_store %arg4[%162, %c0_40], %145 {strides = array<i32>} : memref<64x64xf32, #tpu.memory_space<vmem>>, vector<8x32xf32>,
    %164 = arith.index_cast %119 : i32 to index
    %c32_41 = arith.constant 32 : index
    %165 = vector.load %arg4[%164, %c32_41] : memref<64x64xf32, #tpu.memory_space<vmem>>, vector<8x32xf32>
    tpu.vector_store %arg4[%164, %c32_41], %161 {strides = array<i32>} : memref<64x64xf32, #tpu.memory_space<vmem>>, vector<8x32xf32>,
    %c3_i32 = arith.constant 3 : i32
    %c7_i32_42 = arith.constant 7 : i32
    %166 = arith.subi %c7_i32_42, %c3_i32 : i32
    %c8_i32_43 = arith.constant 8 : i32
    %167 = arith.muli %c3_i32, %c8_i32_43 : i32
    %168 = tpu.assume_multiple %167, 8 : i32
    %c8_i32_44 = arith.constant 8 : i32
    %169 = arith.muli %166, %c8_i32_44 : i32
    %170 = tpu.assume_multiple %169, 8 : i32
    %171 = arith.index_cast %168 : i32 to index
    %c0_45 = arith.constant 0 : index
    %172 = vector.load %arg5[%171, %c0_45] : memref<64x256xf32, #tpu.memory_space<vmem>>, vector<8x128xf32>
    %173 = arith.truncf %145 : vector<8x32xf32> to vector<8x32xbf16>
    %cst_46 = arith.constant dense<0.000000e+00> : vector<8x128xf32>
    %174 = tpu.matmul %173, %9, %cst_46 {dimension_numbers = #tpu.dot_dimension_numbers<[1], [0], [0], [1], [0, 0, 1, 1], [], []>} : vector<8x32xbf16>, vector<32x128xbf16>, vector<8x128xf32> -> vector<8x128xf32>
    %175 = arith.addf %172, %174 : vector<8x128xf32>
    %176 = arith.index_cast %170 : i32 to index
    %c128_47 = arith.constant 128 : index
    %177 = vector.load %arg5[%176, %c128_47] : memref<64x256xf32, #tpu.memory_space<vmem>>, vector<8x128xf32>
    %178 = arith.truncf %161 : vector<8x32xf32> to vector<8x32xbf16>
    %cst_48 = arith.constant dense<0.000000e+00> : vector<8x128xf32>
    %179 = tpu.matmul %178, %11, %cst_48 {dimension_numbers = #tpu.dot_dimension_numbers<[1], [0], [0], [1], [0, 0, 1, 1], [], []>} : vector<8x32xbf16>, vector<32x128xbf16>, vector<8x128xf32> -> vector<8x128xf32>
    %180 = arith.addf %177, %179 : vector<8x128xf32>
    %181 = vector.extract_strided_slice %175 {offsets = [0, 0], sizes = [8, 96], strides = [1, 1]} : vector<8x128xf32> to vector<8x96xf32>
    %182 = arith.negf %181 : vector<8x96xf32>
    %183 = math.exp %182 : vector<8x96xf32>
    %cst_49 = arith.constant 1.000000e+00 : f32
    %184 = vector.broadcast %cst_49 : f32 to vector<8x96xf32>
    %185 = arith.addf %184, %183 : vector<8x96xf32>
    %186 = arith.divf %184, %185 : vector<8x96xf32>
    %187 = vector.extract_strided_slice %186 {offsets = [0, 0], sizes = [8, 32], strides = [1, 1]} : vector<8x96xf32> to vector<8x32xf32>
    %188 = vector.extract_strided_slice %186 {offsets = [0, 32], sizes = [8, 32], strides = [1, 1]} : vector<8x96xf32> to vector<8x32xf32>
    %189 = vector.extract_strided_slice %186 {offsets = [0, 64], sizes = [8, 32], strides = [1, 1]} : vector<8x96xf32> to vector<8x32xf32>
    %190 = vector.extract_strided_slice %175 {offsets = [0, 96], sizes = [8, 32], strides = [1, 1]} : vector<8x128xf32> to vector<8x32xf32>
    %191 = math.tanh %190 : vector<8x32xf32>
    %192 = arith.mulf %188, %143 : vector<8x32xf32>
    %193 = arith.mulf %187, %191 : vector<8x32xf32>
    %194 = arith.addf %192, %193 : vector<8x32xf32>
    %195 = math.tanh %194 : vector<8x32xf32>
    %196 = arith.mulf %189, %195 : vector<8x32xf32>
    %197 = vector.extract_strided_slice %180 {offsets = [0, 0], sizes = [8, 96], strides = [1, 1]} : vector<8x128xf32> to vector<8x96xf32>
    %198 = arith.negf %197 : vector<8x96xf32>
    %199 = math.exp %198 : vector<8x96xf32>
    %cst_50 = arith.constant 1.000000e+00 : f32
    %200 = vector.broadcast %cst_50 : f32 to vector<8x96xf32>
    %201 = arith.addf %200, %199 : vector<8x96xf32>
    %202 = arith.divf %200, %201 : vector<8x96xf32>
    %203 = vector.extract_strided_slice %202 {offsets = [0, 0], sizes = [8, 32], strides = [1, 1]} : vector<8x96xf32> to vector<8x32xf32>
    %204 = vector.extract_strided_slice %202 {offsets = [0, 32], sizes = [8, 32], strides = [1, 1]} : vector<8x96xf32> to vector<8x32xf32>
    %205 = vector.extract_strided_slice %202 {offsets = [0, 64], sizes = [8, 32], strides = [1, 1]} : vector<8x96xf32> to vector<8x32xf32>
    %206 = vector.extract_strided_slice %180 {offsets = [0, 96], sizes = [8, 32], strides = [1, 1]} : vector<8x128xf32> to vector<8x32xf32>
    %207 = math.tanh %206 : vector<8x32xf32>
    %208 = arith.mulf %204, %159 : vector<8x32xf32>
    %209 = arith.mulf %203, %207 : vector<8x32xf32>
    %210 = arith.addf %208, %209 : vector<8x32xf32>
    %211 = math.tanh %210 : vector<8x32xf32>
    %212 = arith.mulf %205, %211 : vector<8x32xf32>
    %213 = arith.index_cast %168 : i32 to index
    %c0_51 = arith.constant 0 : index
    %214 = vector.load %arg4[%213, %c0_51] : memref<64x64xf32, #tpu.memory_space<vmem>>, vector<8x32xf32>
    tpu.vector_store %arg4[%213, %c0_51], %196 {strides = array<i32>} : memref<64x64xf32, #tpu.memory_space<vmem>>, vector<8x32xf32>,
    %215 = arith.index_cast %170 : i32 to index
    %c32_52 = arith.constant 32 : index
    %216 = vector.load %arg4[%215, %c32_52] : memref<64x64xf32, #tpu.memory_space<vmem>>, vector<8x32xf32>
    tpu.vector_store %arg4[%215, %c32_52], %212 {strides = array<i32>} : memref<64x64xf32, #tpu.memory_space<vmem>>, vector<8x32xf32>,
    %c4_i32 = arith.constant 4 : i32
    %c7_i32_53 = arith.constant 7 : i32
    %217 = arith.subi %c7_i32_53, %c4_i32 : i32
    %c8_i32_54 = arith.constant 8 : i32
    %218 = arith.muli %c4_i32, %c8_i32_54 : i32
    %219 = tpu.assume_multiple %218, 8 : i32
    %c8_i32_55 = arith.constant 8 : i32
    %220 = arith.muli %217, %c8_i32_55 : i32
    %221 = tpu.assume_multiple %220, 8 : i32
    %222 = arith.index_cast %219 : i32 to index
    %c0_56 = arith.constant 0 : index
    %223 = vector.load %arg5[%222, %c0_56] : memref<64x256xf32, #tpu.memory_space<vmem>>, vector<8x128xf32>
    %224 = arith.truncf %196 : vector<8x32xf32> to vector<8x32xbf16>
    %cst_57 = arith.constant dense<0.000000e+00> : vector<8x128xf32>
    %225 = tpu.matmul %224, %9, %cst_57 {dimension_numbers = #tpu.dot_dimension_numbers<[1], [0], [0], [1], [0, 0, 1, 1], [], []>} : vector<8x32xbf16>, vector<32x128xbf16>, vector<8x128xf32> -> vector<8x128xf32>
    %226 = arith.addf %223, %225 : vector<8x128xf32>
    %227 = arith.index_cast %221 : i32 to index
    %c128_58 = arith.constant 128 : index
    %228 = vector.load %arg5[%227, %c128_58] : memref<64x256xf32, #tpu.memory_space<vmem>>, vector<8x128xf32>
    %229 = arith.truncf %212 : vector<8x32xf32> to vector<8x32xbf16>
    %cst_59 = arith.constant dense<0.000000e+00> : vector<8x128xf32>
    %230 = tpu.matmul %229, %11, %cst_59 {dimension_numbers = #tpu.dot_dimension_numbers<[1], [0], [0], [1], [0, 0, 1, 1], [], []>} : vector<8x32xbf16>, vector<32x128xbf16>, vector<8x128xf32> -> vector<8x128xf32>
    %231 = arith.addf %228, %230 : vector<8x128xf32>
    %232 = vector.extract_strided_slice %226 {offsets = [0, 0], sizes = [8, 96], strides = [1, 1]} : vector<8x128xf32> to vector<8x96xf32>
    %233 = arith.negf %232 : vector<8x96xf32>
    %234 = math.exp %233 : vector<8x96xf32>
    %cst_60 = arith.constant 1.000000e+00 : f32
    %235 = vector.broadcast %cst_60 : f32 to vector<8x96xf32>
    %236 = arith.addf %235, %234 : vector<8x96xf32>
    %237 = arith.divf %235, %236 : vector<8x96xf32>
    %238 = vector.extract_strided_slice %237 {offsets = [0, 0], sizes = [8, 32], strides = [1, 1]} : vector<8x96xf32> to vector<8x32xf32>
    %239 = vector.extract_strided_slice %237 {offsets = [0, 32], sizes = [8, 32], strides = [1, 1]} : vector<8x96xf32> to vector<8x32xf32>
    %240 = vector.extract_strided_slice %237 {offsets = [0, 64], sizes = [8, 32], strides = [1, 1]} : vector<8x96xf32> to vector<8x32xf32>
    %241 = vector.extract_strided_slice %226 {offsets = [0, 96], sizes = [8, 32], strides = [1, 1]} : vector<8x128xf32> to vector<8x32xf32>
    %242 = math.tanh %241 : vector<8x32xf32>
    %243 = arith.mulf %239, %194 : vector<8x32xf32>
    %244 = arith.mulf %238, %242 : vector<8x32xf32>
    %245 = arith.addf %243, %244 : vector<8x32xf32>
    %246 = math.tanh %245 : vector<8x32xf32>
    %247 = arith.mulf %240, %246 : vector<8x32xf32>
    %248 = vector.extract_strided_slice %231 {offsets = [0, 0], sizes = [8, 96], strides = [1, 1]} : vector<8x128xf32> to vector<8x96xf32>
    %249 = arith.negf %248 : vector<8x96xf32>
    %250 = math.exp %249 : vector<8x96xf32>
    %cst_61 = arith.constant 1.000000e+00 : f32
    %251 = vector.broadcast %cst_61 : f32 to vector<8x96xf32>
    %252 = arith.addf %251, %250 : vector<8x96xf32>
    %253 = arith.divf %251, %252 : vector<8x96xf32>
    %254 = vector.extract_strided_slice %253 {offsets = [0, 0], sizes = [8, 32], strides = [1, 1]} : vector<8x96xf32> to vector<8x32xf32>
    %255 = vector.extract_strided_slice %253 {offsets = [0, 32], sizes = [8, 32], strides = [1, 1]} : vector<8x96xf32> to vector<8x32xf32>
    %256 = vector.extract_strided_slice %253 {offsets = [0, 64], sizes = [8, 32], strides = [1, 1]} : vector<8x96xf32> to vector<8x32xf32>
    %257 = vector.extract_strided_slice %231 {offsets = [0, 96], sizes = [8, 32], strides = [1, 1]} : vector<8x128xf32> to vector<8x32xf32>
    %258 = math.tanh %257 : vector<8x32xf32>
    %259 = arith.mulf %255, %210 : vector<8x32xf32>
    %260 = arith.mulf %254, %258 : vector<8x32xf32>
    %261 = arith.addf %259, %260 : vector<8x32xf32>
    %262 = math.tanh %261 : vector<8x32xf32>
    %263 = arith.mulf %256, %262 : vector<8x32xf32>
    %264 = arith.index_cast %219 : i32 to index
    %c0_62 = arith.constant 0 : index
    %265 = vector.load %arg4[%264, %c0_62] : memref<64x64xf32, #tpu.memory_space<vmem>>, vector<8x32xf32>
    tpu.vector_store %arg4[%264, %c0_62], %247 {strides = array<i32>} : memref<64x64xf32, #tpu.memory_space<vmem>>, vector<8x32xf32>,
    %266 = arith.index_cast %221 : i32 to index
    %c32_63 = arith.constant 32 : index
    %267 = vector.load %arg4[%266, %c32_63] : memref<64x64xf32, #tpu.memory_space<vmem>>, vector<8x32xf32>
    tpu.vector_store %arg4[%266, %c32_63], %263 {strides = array<i32>} : memref<64x64xf32, #tpu.memory_space<vmem>>, vector<8x32xf32>,
    %c5_i32 = arith.constant 5 : i32
    %c7_i32_64 = arith.constant 7 : i32
    %268 = arith.subi %c7_i32_64, %c5_i32 : i32
    %c8_i32_65 = arith.constant 8 : i32
    %269 = arith.muli %c5_i32, %c8_i32_65 : i32
    %270 = tpu.assume_multiple %269, 8 : i32
    %c8_i32_66 = arith.constant 8 : i32
    %271 = arith.muli %268, %c8_i32_66 : i32
    %272 = tpu.assume_multiple %271, 8 : i32
    %273 = arith.index_cast %270 : i32 to index
    %c0_67 = arith.constant 0 : index
    %274 = vector.load %arg5[%273, %c0_67] : memref<64x256xf32, #tpu.memory_space<vmem>>, vector<8x128xf32>
    %275 = arith.truncf %247 : vector<8x32xf32> to vector<8x32xbf16>
    %cst_68 = arith.constant dense<0.000000e+00> : vector<8x128xf32>
    %276 = tpu.matmul %275, %9, %cst_68 {dimension_numbers = #tpu.dot_dimension_numbers<[1], [0], [0], [1], [0, 0, 1, 1], [], []>} : vector<8x32xbf16>, vector<32x128xbf16>, vector<8x128xf32> -> vector<8x128xf32>
    %277 = arith.addf %274, %276 : vector<8x128xf32>
    %278 = arith.index_cast %272 : i32 to index
    %c128_69 = arith.constant 128 : index
    %279 = vector.load %arg5[%278, %c128_69] : memref<64x256xf32, #tpu.memory_space<vmem>>, vector<8x128xf32>
    %280 = arith.truncf %263 : vector<8x32xf32> to vector<8x32xbf16>
    %cst_70 = arith.constant dense<0.000000e+00> : vector<8x128xf32>
    %281 = tpu.matmul %280, %11, %cst_70 {dimension_numbers = #tpu.dot_dimension_numbers<[1], [0], [0], [1], [0, 0, 1, 1], [], []>} : vector<8x32xbf16>, vector<32x128xbf16>, vector<8x128xf32> -> vector<8x128xf32>
    %282 = arith.addf %279, %281 : vector<8x128xf32>
    %283 = vector.extract_strided_slice %277 {offsets = [0, 0], sizes = [8, 96], strides = [1, 1]} : vector<8x128xf32> to vector<8x96xf32>
    %284 = arith.negf %283 : vector<8x96xf32>
    %285 = math.exp %284 : vector<8x96xf32>
    %cst_71 = arith.constant 1.000000e+00 : f32
    %286 = vector.broadcast %cst_71 : f32 to vector<8x96xf32>
    %287 = arith.addf %286, %285 : vector<8x96xf32>
    %288 = arith.divf %286, %287 : vector<8x96xf32>
    %289 = vector.extract_strided_slice %288 {offsets = [0, 0], sizes = [8, 32], strides = [1, 1]} : vector<8x96xf32> to vector<8x32xf32>
    %290 = vector.extract_strided_slice %288 {offsets = [0, 32], sizes = [8, 32], strides = [1, 1]} : vector<8x96xf32> to vector<8x32xf32>
    %291 = vector.extract_strided_slice %288 {offsets = [0, 64], sizes = [8, 32], strides = [1, 1]} : vector<8x96xf32> to vector<8x32xf32>
    %292 = vector.extract_strided_slice %277 {offsets = [0, 96], sizes = [8, 32], strides = [1, 1]} : vector<8x128xf32> to vector<8x32xf32>
    %293 = math.tanh %292 : vector<8x32xf32>
    %294 = arith.mulf %290, %245 : vector<8x32xf32>
    %295 = arith.mulf %289, %293 : vector<8x32xf32>
    %296 = arith.addf %294, %295 : vector<8x32xf32>
    %297 = math.tanh %296 : vector<8x32xf32>
    %298 = arith.mulf %291, %297 : vector<8x32xf32>
    %299 = vector.extract_strided_slice %282 {offsets = [0, 0], sizes = [8, 96], strides = [1, 1]} : vector<8x128xf32> to vector<8x96xf32>
    %300 = arith.negf %299 : vector<8x96xf32>
    %301 = math.exp %300 : vector<8x96xf32>
    %cst_72 = arith.constant 1.000000e+00 : f32
    %302 = vector.broadcast %cst_72 : f32 to vector<8x96xf32>
    %303 = arith.addf %302, %301 : vector<8x96xf32>
    %304 = arith.divf %302, %303 : vector<8x96xf32>
    %305 = vector.extract_strided_slice %304 {offsets = [0, 0], sizes = [8, 32], strides = [1, 1]} : vector<8x96xf32> to vector<8x32xf32>
    %306 = vector.extract_strided_slice %304 {offsets = [0, 32], sizes = [8, 32], strides = [1, 1]} : vector<8x96xf32> to vector<8x32xf32>
    %307 = vector.extract_strided_slice %304 {offsets = [0, 64], sizes = [8, 32], strides = [1, 1]} : vector<8x96xf32> to vector<8x32xf32>
    %308 = vector.extract_strided_slice %282 {offsets = [0, 96], sizes = [8, 32], strides = [1, 1]} : vector<8x128xf32> to vector<8x32xf32>
    %309 = math.tanh %308 : vector<8x32xf32>
    %310 = arith.mulf %306, %261 : vector<8x32xf32>
    %311 = arith.mulf %305, %309 : vector<8x32xf32>
    %312 = arith.addf %310, %311 : vector<8x32xf32>
    %313 = math.tanh %312 : vector<8x32xf32>
    %314 = arith.mulf %307, %313 : vector<8x32xf32>
    %315 = arith.index_cast %270 : i32 to index
    %c0_73 = arith.constant 0 : index
    %316 = vector.load %arg4[%315, %c0_73] : memref<64x64xf32, #tpu.memory_space<vmem>>, vector<8x32xf32>
    tpu.vector_store %arg4[%315, %c0_73], %298 {strides = array<i32>} : memref<64x64xf32, #tpu.memory_space<vmem>>, vector<8x32xf32>,
    %317 = arith.index_cast %272 : i32 to index
    %c32_74 = arith.constant 32 : index
    %318 = vector.load %arg4[%317, %c32_74] : memref<64x64xf32, #tpu.memory_space<vmem>>, vector<8x32xf32>
    tpu.vector_store %arg4[%317, %c32_74], %314 {strides = array<i32>} : memref<64x64xf32, #tpu.memory_space<vmem>>, vector<8x32xf32>,
    %c6_i32 = arith.constant 6 : i32
    %c7_i32_75 = arith.constant 7 : i32
    %319 = arith.subi %c7_i32_75, %c6_i32 : i32
    %c8_i32_76 = arith.constant 8 : i32
    %320 = arith.muli %c6_i32, %c8_i32_76 : i32
    %321 = tpu.assume_multiple %320, 8 : i32
    %c8_i32_77 = arith.constant 8 : i32
    %322 = arith.muli %319, %c8_i32_77 : i32
    %323 = tpu.assume_multiple %322, 8 : i32
    %324 = arith.index_cast %321 : i32 to index
    %c0_78 = arith.constant 0 : index
    %325 = vector.load %arg5[%324, %c0_78] : memref<64x256xf32, #tpu.memory_space<vmem>>, vector<8x128xf32>
    %326 = arith.truncf %298 : vector<8x32xf32> to vector<8x32xbf16>
    %cst_79 = arith.constant dense<0.000000e+00> : vector<8x128xf32>
    %327 = tpu.matmul %326, %9, %cst_79 {dimension_numbers = #tpu.dot_dimension_numbers<[1], [0], [0], [1], [0, 0, 1, 1], [], []>} : vector<8x32xbf16>, vector<32x128xbf16>, vector<8x128xf32> -> vector<8x128xf32>
    %328 = arith.addf %325, %327 : vector<8x128xf32>
    %329 = arith.index_cast %323 : i32 to index
    %c128_80 = arith.constant 128 : index
    %330 = vector.load %arg5[%329, %c128_80] : memref<64x256xf32, #tpu.memory_space<vmem>>, vector<8x128xf32>
    %331 = arith.truncf %314 : vector<8x32xf32> to vector<8x32xbf16>
    %cst_81 = arith.constant dense<0.000000e+00> : vector<8x128xf32>
    %332 = tpu.matmul %331, %11, %cst_81 {dimension_numbers = #tpu.dot_dimension_numbers<[1], [0], [0], [1], [0, 0, 1, 1], [], []>} : vector<8x32xbf16>, vector<32x128xbf16>, vector<8x128xf32> -> vector<8x128xf32>
    %333 = arith.addf %330, %332 : vector<8x128xf32>
    %334 = vector.extract_strided_slice %328 {offsets = [0, 0], sizes = [8, 96], strides = [1, 1]} : vector<8x128xf32> to vector<8x96xf32>
    %335 = arith.negf %334 : vector<8x96xf32>
    %336 = math.exp %335 : vector<8x96xf32>
    %cst_82 = arith.constant 1.000000e+00 : f32
    %337 = vector.broadcast %cst_82 : f32 to vector<8x96xf32>
    %338 = arith.addf %337, %336 : vector<8x96xf32>
    %339 = arith.divf %337, %338 : vector<8x96xf32>
    %340 = vector.extract_strided_slice %339 {offsets = [0, 0], sizes = [8, 32], strides = [1, 1]} : vector<8x96xf32> to vector<8x32xf32>
    %341 = vector.extract_strided_slice %339 {offsets = [0, 32], sizes = [8, 32], strides = [1, 1]} : vector<8x96xf32> to vector<8x32xf32>
    %342 = vector.extract_strided_slice %339 {offsets = [0, 64], sizes = [8, 32], strides = [1, 1]} : vector<8x96xf32> to vector<8x32xf32>
    %343 = vector.extract_strided_slice %328 {offsets = [0, 96], sizes = [8, 32], strides = [1, 1]} : vector<8x128xf32> to vector<8x32xf32>
    %344 = math.tanh %343 : vector<8x32xf32>
    %345 = arith.mulf %341, %296 : vector<8x32xf32>
    %346 = arith.mulf %340, %344 : vector<8x32xf32>
    %347 = arith.addf %345, %346 : vector<8x32xf32>
    %348 = math.tanh %347 : vector<8x32xf32>
    %349 = arith.mulf %342, %348 : vector<8x32xf32>
    %350 = vector.extract_strided_slice %333 {offsets = [0, 0], sizes = [8, 96], strides = [1, 1]} : vector<8x128xf32> to vector<8x96xf32>
    %351 = arith.negf %350 : vector<8x96xf32>
    %352 = math.exp %351 : vector<8x96xf32>
    %cst_83 = arith.constant 1.000000e+00 : f32
    %353 = vector.broadcast %cst_83 : f32 to vector<8x96xf32>
    %354 = arith.addf %353, %352 : vector<8x96xf32>
    %355 = arith.divf %353, %354 : vector<8x96xf32>
    %356 = vector.extract_strided_slice %355 {offsets = [0, 0], sizes = [8, 32], strides = [1, 1]} : vector<8x96xf32> to vector<8x32xf32>
    %357 = vector.extract_strided_slice %355 {offsets = [0, 32], sizes = [8, 32], strides = [1, 1]} : vector<8x96xf32> to vector<8x32xf32>
    %358 = vector.extract_strided_slice %355 {offsets = [0, 64], sizes = [8, 32], strides = [1, 1]} : vector<8x96xf32> to vector<8x32xf32>
    %359 = vector.extract_strided_slice %333 {offsets = [0, 96], sizes = [8, 32], strides = [1, 1]} : vector<8x128xf32> to vector<8x32xf32>
    %360 = math.tanh %359 : vector<8x32xf32>
    %361 = arith.mulf %357, %312 : vector<8x32xf32>
    %362 = arith.mulf %356, %360 : vector<8x32xf32>
    %363 = arith.addf %361, %362 : vector<8x32xf32>
    %364 = math.tanh %363 : vector<8x32xf32>
    %365 = arith.mulf %358, %364 : vector<8x32xf32>
    %366 = arith.index_cast %321 : i32 to index
    %c0_84 = arith.constant 0 : index
    %367 = vector.load %arg4[%366, %c0_84] : memref<64x64xf32, #tpu.memory_space<vmem>>, vector<8x32xf32>
    tpu.vector_store %arg4[%366, %c0_84], %349 {strides = array<i32>} : memref<64x64xf32, #tpu.memory_space<vmem>>, vector<8x32xf32>,
    %368 = arith.index_cast %323 : i32 to index
    %c32_85 = arith.constant 32 : index
    %369 = vector.load %arg4[%368, %c32_85] : memref<64x64xf32, #tpu.memory_space<vmem>>, vector<8x32xf32>
    tpu.vector_store %arg4[%368, %c32_85], %365 {strides = array<i32>} : memref<64x64xf32, #tpu.memory_space<vmem>>, vector<8x32xf32>,
    %c7_i32_86 = arith.constant 7 : i32
    %c7_i32_87 = arith.constant 7 : i32
    %370 = arith.subi %c7_i32_87, %c7_i32_86 : i32
    %c8_i32_88 = arith.constant 8 : i32
    %371 = arith.muli %c7_i32_86, %c8_i32_88 : i32
    %372 = tpu.assume_multiple %371, 8 : i32
    %c8_i32_89 = arith.constant 8 : i32
    %373 = arith.muli %370, %c8_i32_89 : i32
    %374 = tpu.assume_multiple %373, 8 : i32
    %375 = arith.index_cast %372 : i32 to index
    %c0_90 = arith.constant 0 : index
    %376 = vector.load %arg5[%375, %c0_90] : memref<64x256xf32, #tpu.memory_space<vmem>>, vector<8x128xf32>
    %377 = arith.truncf %349 : vector<8x32xf32> to vector<8x32xbf16>
    %cst_91 = arith.constant dense<0.000000e+00> : vector<8x128xf32>
    %378 = tpu.matmul %377, %9, %cst_91 {dimension_numbers = #tpu.dot_dimension_numbers<[1], [0], [0], [1], [0, 0, 1, 1], [], []>} : vector<8x32xbf16>, vector<32x128xbf16>, vector<8x128xf32> -> vector<8x128xf32>
    %379 = arith.addf %376, %378 : vector<8x128xf32>
    %380 = arith.index_cast %374 : i32 to index
    %c128_92 = arith.constant 128 : index
    %381 = vector.load %arg5[%380, %c128_92] : memref<64x256xf32, #tpu.memory_space<vmem>>, vector<8x128xf32>
    %382 = arith.truncf %365 : vector<8x32xf32> to vector<8x32xbf16>
    %cst_93 = arith.constant dense<0.000000e+00> : vector<8x128xf32>
    %383 = tpu.matmul %382, %11, %cst_93 {dimension_numbers = #tpu.dot_dimension_numbers<[1], [0], [0], [1], [0, 0, 1, 1], [], []>} : vector<8x32xbf16>, vector<32x128xbf16>, vector<8x128xf32> -> vector<8x128xf32>
    %384 = arith.addf %381, %383 : vector<8x128xf32>
    %385 = vector.extract_strided_slice %379 {offsets = [0, 0], sizes = [8, 96], strides = [1, 1]} : vector<8x128xf32> to vector<8x96xf32>
    %386 = arith.negf %385 : vector<8x96xf32>
    %387 = math.exp %386 : vector<8x96xf32>
    %cst_94 = arith.constant 1.000000e+00 : f32
    %388 = vector.broadcast %cst_94 : f32 to vector<8x96xf32>
    %389 = arith.addf %388, %387 : vector<8x96xf32>
    %390 = arith.divf %388, %389 : vector<8x96xf32>
    %391 = vector.extract_strided_slice %390 {offsets = [0, 0], sizes = [8, 32], strides = [1, 1]} : vector<8x96xf32> to vector<8x32xf32>
    %392 = vector.extract_strided_slice %390 {offsets = [0, 32], sizes = [8, 32], strides = [1, 1]} : vector<8x96xf32> to vector<8x32xf32>
    %393 = vector.extract_strided_slice %390 {offsets = [0, 64], sizes = [8, 32], strides = [1, 1]} : vector<8x96xf32> to vector<8x32xf32>
    %394 = vector.extract_strided_slice %379 {offsets = [0, 96], sizes = [8, 32], strides = [1, 1]} : vector<8x128xf32> to vector<8x32xf32>
    %395 = math.tanh %394 : vector<8x32xf32>
    %396 = arith.mulf %392, %347 : vector<8x32xf32>
    %397 = arith.mulf %391, %395 : vector<8x32xf32>
    %398 = arith.addf %396, %397 : vector<8x32xf32>
    %399 = math.tanh %398 : vector<8x32xf32>
    %400 = arith.mulf %393, %399 : vector<8x32xf32>
    %401 = vector.extract_strided_slice %384 {offsets = [0, 0], sizes = [8, 96], strides = [1, 1]} : vector<8x128xf32> to vector<8x96xf32>
    %402 = arith.negf %401 : vector<8x96xf32>
    %403 = math.exp %402 : vector<8x96xf32>
    %cst_95 = arith.constant 1.000000e+00 : f32
    %404 = vector.broadcast %cst_95 : f32 to vector<8x96xf32>
    %405 = arith.addf %404, %403 : vector<8x96xf32>
    %406 = arith.divf %404, %405 : vector<8x96xf32>
    %407 = vector.extract_strided_slice %406 {offsets = [0, 0], sizes = [8, 32], strides = [1, 1]} : vector<8x96xf32> to vector<8x32xf32>
    %408 = vector.extract_strided_slice %406 {offsets = [0, 32], sizes = [8, 32], strides = [1, 1]} : vector<8x96xf32> to vector<8x32xf32>
    %409 = vector.extract_strided_slice %406 {offsets = [0, 64], sizes = [8, 32], strides = [1, 1]} : vector<8x96xf32> to vector<8x32xf32>
    %410 = vector.extract_strided_slice %384 {offsets = [0, 96], sizes = [8, 32], strides = [1, 1]} : vector<8x128xf32> to vector<8x32xf32>
    %411 = math.tanh %410 : vector<8x32xf32>
    %412 = arith.mulf %408, %363 : vector<8x32xf32>
    %413 = arith.mulf %407, %411 : vector<8x32xf32>
    %414 = arith.addf %412, %413 : vector<8x32xf32>
    %415 = math.tanh %414 : vector<8x32xf32>
    %416 = arith.mulf %409, %415 : vector<8x32xf32>
    %417 = arith.index_cast %372 : i32 to index
    %c0_96 = arith.constant 0 : index
    %418 = vector.load %arg4[%417, %c0_96] : memref<64x64xf32, #tpu.memory_space<vmem>>, vector<8x32xf32>
    tpu.vector_store %arg4[%417, %c0_96], %400 {strides = array<i32>} : memref<64x64xf32, #tpu.memory_space<vmem>>, vector<8x32xf32>,
    %419 = arith.index_cast %374 : i32 to index
    %c32_97 = arith.constant 32 : index
    %420 = vector.load %arg4[%419, %c32_97] : memref<64x64xf32, #tpu.memory_space<vmem>>, vector<8x32xf32>
    tpu.vector_store %arg4[%419, %c32_97], %416 {strides = array<i32>} : memref<64x64xf32, #tpu.memory_space<vmem>>, vector<8x32xf32>,
    %c8_i32_98 = arith.constant 8 : i32
    return
  }
}

</mosaic_0001>

<llo_original>
// kernel: tpu_custom_call.1
$region0: #{tpu_custom_call.1}
  #allocation0 [shape = 'u32[]', space=smem, size = 0x4, offset = 0x4, fixed_abs, tag = 'smem constant byte address 0x4 - core index']
  #allocation1 [shape = 'u32[144,128]{1,0:T(1,128)}', space=vmem, size = 0x12000, scoped, tag = 'internal scratch']
  #allocation2 [shape = 'f32[64,256]{1,0:T(8,128)}', space=vmem, size = 0x10000, scoped, tag = 'scratch operand']
  %s0 = inlined_call_operand.vmem [shape: f32[64,32], index: 0, kind: input, shape index: {}]
  %s1 = inlined_call_operand.vmem [shape: bf16[32,256], index: 1, kind: input, shape index: {}]
  %s2 = inlined_call_operand.vmem [shape: bf16[2,32,128], index: 2, kind: input, shape index: {}]
  %s3 = inlined_call_operand.vmem [shape: f32[1,256], index: 3, kind: input, shape index: {}]
  %s4 = inlined_call_operand.hbm [shape: f32[64,64], index: 4, kind: output, shape index: {}]
  %s5 = sld [smem:[#allocation0]]
  $region26: #{tpu_custom_call.1} parent=0
    _
  %s7 = ssub.s32 1, %s5
  %s8 = scalar_select 0, %s7, %s5
  $region1: #{tpu_custom_call.1} parent=0
    #allocation3 [shape = 'u8[32768]{0}', space=vmem, size = 0x8000, scoped, tag = 'output window, operand 0, single buffered']
    #allocation4 [shape = 's32[1]{0}', space=sflag, size = 0x4, scoped, tag = 'scoped memory for tpu_custom_call.1']
    %9 = vsyncpa [#allocation4], 0
    // Predicated region
    $region2: #{tpu_custom_call.1} parent=1 // pred_check
      _
    $region3: #{tpu_custom_call.1} parent=1 // pred_check_branch
      %11 = sbr.rel (0) target = $region5
    $region4: #{tpu_custom_call.1} parent=1 // pred_region
      _
    $region5: #{tpu_custom_call.1} parent=1 // pred_fallthru
      _
    // Predicated region
    $region6: #{tpu_custom_call.1} parent=1 // pred_check
      _
    $region7: #{tpu_custom_call.1} parent=1 // pred_check_branch
      %13 = sbr.rel (0) target = $region9
    $region8: #{tpu_custom_call.1} parent=1 // pred_region
      _
    $region9: #{tpu_custom_call.1} parent=1 // pred_fallthru
      _
    // Predicated region
    $region10: #{tpu_custom_call.1} parent=1 // pred_check
      _
    $region11: #{tpu_custom_call.1} parent=1 // pred_check_branch
      %15 = sbr.rel (0) target = $region13
    $region12: #{tpu_custom_call.1} parent=1 // pred_region
      _
    $region13: #{tpu_custom_call.1} parent=1 // pred_fallthru
      _
    // Predicated region
    $region14: #{tpu_custom_call.1} parent=1 // pred_check
      _
    $region15: #{tpu_custom_call.1} parent=1 // pred_check_branch
      %17 = sbr.rel (0) target = $region17
    $region16: #{tpu_custom_call.1} parent=1 // pred_region
      _
    $region17: #{tpu_custom_call.1} parent=1 // pred_fallthru
      _
    %v19 = vld [vmem:[%s0] sm:$0xff]
    %v20 = vld [vmem:[%s0 + $0x8] sm:$0xff]
    %v21 = vld [vmem:[%s0 + $0x10] sm:$0xff]
    %v22 = vld [vmem:[%s0 + $0x18] sm:$0xff]
    %v23 = vld [vmem:[%s0 + $0x20] sm:$0xff]
    %v24 = vld [vmem:[%s0 + $0x28] sm:$0xff]
    %v25 = vld [vmem:[%s0 + $0x30] sm:$0xff]
    %v26 = vld [vmem:[%s0 + $0x38] sm:$0xff]
    %v27 = vpack.c.bf16 %v20, %v19
    %v28 = vpack.c.bf16 %v22, %v21
    %v29 = vpack.c.bf16 %v24, %v23
    %v30 = vpack.c.bf16 %v26, %v25
    %v31 = vld [vmem:[%s1] sm:$0xff]
    %v32 = vld [vmem:[%s1 + $0x8] sm:$0xff]
    %v33 = vld [vmem:[%s1 + $0x10] sm:$0xff]
    %v34 = vld [vmem:[%s1 + $0x18] sm:$0xff]
    %v35 = vld [vmem:[%s3] sm:$0x3]
    %v37 = vlaneseq
    %v38 = vshrl.u32 %v37, 7
    %v39 = vsub.s32 0, %v38
    %v40 = vrot.slane %v35, %v39
    %v41 = vlaneseq
    %v42 = vshrl.u32 %v41, 7
    %v43 = vsub.s32 1, %v42
    %v44 = vrot.slane %v35, %v43
    %v51 = vunpack.c.l.b16 %v31
    %v52 = vunpack.c.h.b16 %v31
    %v53 = vunpack.c.l.b16 %v32
    %v54 = vunpack.c.h.b16 %v32
    %v55 = vunpack.c.l.b16 %v33
    %v56 = vunpack.c.h.b16 %v33
    %v57 = vunpack.c.l.b16 %v34
    %v58 = vunpack.c.h.b16 %v34
    %v59 = vpack.c.b16 %v53, %v51
    %v60 = vpack.c.b16 %v54, %v52
    %v61 = vpack.c.b16 %v57, %v55
    %v62 = vpack.c.b16 %v58, %v56
    %vm67 = vcmask 261120
    %v69 = vsel %vm67, %v27, 0
    %v72 = vsel %vm67, %v28, 0
    %v75 = vsel %vm67, %v29, 0
    %v78 = vsel %vm67, %v30, 0
    %80 = vmatprep.subr.bf16.mxu0 0
    %81 = vmatpush1.bf16.msra.mxu0 0
    %82 = vmatprep.subr.bf16.mxu0 0
    %83 = vmatpush1.bf16.msra.mxu0 0
    %84 = vmatprep.subr.bf16.mxu0 0
    %85 = vmatpush1.bf16.msra.mxu0 0
    %86 = vmatprep.subr.bf16.mxu0 0
    %87 = vmatpush1.bf16.msra.mxu0 0
    %88 = vmatprep.subr.bf16.mxu0 0
    %89 = vmatpush1.bf16.msra.mxu0 0
    %90 = vmatprep.subr.bf16.mxu0 0
    %91 = vmatpush1.bf16.msra.mxu0 0
    %92 = vmatprep.subr.bf16.mxu0 %v62
    %93 = vmatpush1.bf16.msra.mxu0 %v61
    %94 = vmatprep.subr.bf16.mxu0 %v60
    %95 = vmatpush1.bf16.msra.mxu0 %v59
    %96 = vmatprep.subr.bf16.mxu0 0
    %97 = vmatpush2.bf16.msra.mxu0 0
    %98 = vmatprep.subr.bf16.mxu0 0
    %99 = vmatpush2.bf16.msra.mxu0 0
    %100 = vmatprep.subr.bf16.mxu0 0
    %101 = vmatpush2.bf16.msra.mxu0 0
    %102 = vmatprep.subr.bf16.mxu0 0
    %103 = vmatpush2.bf16.msra.mxu0 0
    %104 = vmatprep.subr.bf16.mxu0 0
    %105 = vmatpush2.bf16.msra.mxu0 0
    %106 = vmatprep.subr.bf16.mxu0 0
    %107 = vmatpush2.bf16.msra.mxu0 0
    %108 = vmatprep.subr.bf16.mxu0 0
    %109 = vmatpush2.bf16.msra.mxu0 0
    %110 = vmatprep.subr.bf16.mxu0 0
    %111 = vmatpush2.bf16.msra.mxu0 0
    %112 = vmatprep.mubr.bf16.mxu0 0
    %113 = vmatmul.mubr.bf16.gmra.mxu0 %v69
    %v114 = vpop.f32.mrf.mxu0
    %v115 = vadd.f32 %v40, %v114
    %v116 = vpop.f32.mrf.mxu0
    %v117 = vadd.f32 %v44, %v116
    %v118 = vpop.f32.mrf.mxu0
    %v119 = vadd.f32 %v40, %v118
    %v120 = vpop.f32.mrf.mxu0
    %v121 = vadd.f32 %v44, %v120
    %122 = vmatprep.mubr.bf16.mxu0 0
    %123 = vmatmul.mubr.bf16.gmra.mxu0 %v72
    %v124 = vpop.f32.mrf.mxu0
    %v125 = vadd.f32 %v40, %v124
    %v126 = vpop.f32.mrf.mxu0
    %v127 = vadd.f32 %v44, %v126
    %v128 = vpop.f32.mrf.mxu0
    %v129 = vadd.f32 %v40, %v128
    %v130 = vpop.f32.mrf.mxu0
    %v131 = vadd.f32 %v44, %v130
    %132 = vmatprep.mubr.bf16.mxu0 0
    %133 = vmatmul.mubr.bf16.gmra.mxu0 %v75
    %v134 = vpop.f32.mrf.mxu0
    %v135 = vadd.f32 %v40, %v134
    %v136 = vpop.f32.mrf.mxu0
    %v137 = vadd.f32 %v44, %v136
    %v138 = vpop.f32.mrf.mxu0
    %v139 = vadd.f32 %v40, %v138
    %v140 = vpop.f32.mrf.mxu0
    %v141 = vadd.f32 %v44, %v140
    %142 = vmatprep.mubr.bf16.mxu0 0
    %143 = vmatmul.mubr.bf16.gmra.mxu0 %v78
    %v144 = vpop.f32.mrf.mxu0
    %v145 = vadd.f32 %v40, %v144
    %v146 = vpop.f32.mrf.mxu0
    %v147 = vadd.f32 %v44, %v146
    %v148 = vpop.f32.mrf.mxu0
    %v149 = vadd.f32 %v40, %v148
    %v150 = vpop.f32.mrf.mxu0
    %v151 = vadd.f32 %v44, %v150
    %152 = vdwg.mxu0
    %153 = vst [vmem:[#allocation2] sm:$0xff] %v115
    %154 = vst [vmem:[#allocation2 + $0x8] sm:$0xff] %v117
    %155 = vst [vmem:[#allocation2 + $0x10] sm:$0xff] %v119
    %156 = vst [vmem:[#allocation2 + $0x18] sm:$0xff] %v121
    %157 = vst [vmem:[#allocation2 + $0x20] sm:$0xff] %v125
    %158 = vst [vmem:[#allocation2 + $0x28] sm:$0xff] %v127
    %159 = vst [vmem:[#allocation2 + $0x30] sm:$0xff] %v129
    %160 = vst [vmem:[#allocation2 + $0x38] sm:$0xff] %v131
    %161 = vst [vmem:[#allocation2 + $0x40] sm:$0xff] %v135
    %162 = vst [vmem:[#allocation2 + $0x48] sm:$0xff] %v137
    %163 = vst [vmem:[#allocation2 + $0x50] sm:$0xff] %v139
    %164 = vst [vmem:[#allocation2 + $0x58] sm:$0xff] %v141
    %165 = vst [vmem:[#allocation2 + $0x60] sm:$0xff] %v145
    %166 = vst [vmem:[#allocation2 + $0x68] sm:$0xff] %v147
    %167 = vst [vmem:[#allocation2 + $0x70] sm:$0xff] %v149
    %168 = vst [vmem:[#allocation2 + $0x78] sm:$0xff] %v151
    %v169 = vld [vmem:[%s2] sm:$0xf]
    %v170 = vld [vmem:[%s2 + $0x4] sm:$0xf]
    %v171 = vld [vmem:[%s2 + $0x8] sm:$0xf]
    %v172 = vld [vmem:[%s2 + $0xc] sm:$0xf]
    %s173 = scalar_lea.vmem %s2, 16
    %v174 = vld [vmem:[%s173] sm:$0xf]
    %v175 = vld [vmem:[%s173 + $0x4] sm:$0xf]
    %v176 = vld [vmem:[%s173 + $0x8] sm:$0xf]
    %v177 = vld [vmem:[%s173 + $0xc] sm:$0xf]
    %s178 = smul.u32 0, 2
    %s179 = smul.addr %s178, 8
    %s180 = scalar_lea.vmem [#allocation2], %s179
    %v181 = vld [vmem:[%s180] sm:$0xff]
    %v186 = vunpack.c.l.b16 %v169
    %v187 = vunpack.c.l.b16 %v170
    %v188 = vunpack.c.l.b16 %v171
    %v189 = vunpack.c.l.b16 %v172
    %v190 = vpack.c.b16 %v187, %v186
    %v191 = vpack.c.b16 %v189, %v188
    %v195 = vsel %vm67, 0, 0
    %197 = vmatprep.subr.bf16.mxu0 0
    %198 = vmatpush1.bf16.msra.mxu0 0
    %199 = vmatprep.subr.bf16.mxu0 0
    %200 = vmatpush1.bf16.msra.mxu0 0
    %201 = vmatprep.subr.bf16.mxu0 0
    %202 = vmatpush1.bf16.msra.mxu0 0
    %203 = vmatprep.subr.bf16.mxu0 0
    %204 = vmatpush1.bf16.msra.mxu0 0
    %205 = vmatprep.subr.bf16.mxu0 0
    %206 = vmatpush1.bf16.msra.mxu0 0
    %207 = vmatprep.subr.bf16.mxu0 0
    %208 = vmatpush1.bf16.msra.mxu0 0
    %209 = vmatprep.subr.bf16.mxu0 0
    %210 = vmatpush1.bf16.msra.mxu0 %v191
    %211 = vmatprep.subr.bf16.mxu0 0
    %212 = vmatpush1.bf16.msra.mxu0 %v190
    %213 = vmatprep.subr.bf16.mxu0 0
    %214 = vmatpush2.bf16.msra.mxu0 0
    %215 = vmatprep.subr.bf16.mxu0 0
    %216 = vmatpush2.bf16.msra.mxu0 0
    %217 = vmatprep.subr.bf16.mxu0 0
    %218 = vmatpush2.bf16.msra.mxu0 0
    %219 = vmatprep.subr.bf16.mxu0 0
    %220 = vmatpush2.bf16.msra.mxu0 0
    %221 = vmatprep.subr.bf16.mxu0 0
    %222 = vmatpush2.bf16.msra.mxu0 0
    %223 = vmatprep.subr.bf16.mxu0 0
    %224 = vmatpush2.bf16.msra.mxu0 0
    %225 = vmatprep.subr.bf16.mxu0 0
    %226 = vmatpush2.bf16.msra.mxu0 0
    %227 = vmatprep.subr.bf16.mxu0 0
    %228 = vmatpush2.bf16.msra.mxu0 0
    %229 = vmatprep.mubr.bf16.mxu0 0
    %230 = vmatmul.mubr.bf16.gmra.mxu0 %v195
    %v231 = vpop.f32.mrf.mxu0
    %v232 = vadd.f32 0.0, %v231
    %v233 = vpop.f32.mrf.mxu0
    %v234 = vpop.f32.mrf.mxu0
    %v235 = vpop.f32.mrf.mxu0
    %236 = vdwg.mxu0
    %v237 = vadd.f32 %v181, %v232
    %s238 = smul.u32 7, 2
    %s239 = smul.addr %s238, 8
    %s240 = scalar_lea.vmem [#allocation2], %s239
    %v241 = vld [vmem:[%s240 + $0x8] sm:$0xff]
    %v246 = vunpack.c.l.b16 %v174
    %v247 = vunpack.c.l.b16 %v175
    %v248 = vunpack.c.l.b16 %v176
    %v249 = vunpack.c.l.b16 %v177
    %v250 = vpack.c.b16 %v247, %v246
    %v251 = vpack.c.b16 %v249, %v248
    %254 = vmatprep.subr.bf16.mxu0 0
    %255 = vmatpush1.bf16.msra.mxu0 0
    %256 = vmatprep.subr.bf16.mxu0 0
    %257 = vmatpush1.bf16.msra.mxu0 0
    %258 = vmatprep.subr.bf16.mxu0 0
    %259 = vmatpush1.bf16.msra.mxu0 0
    %260 = vmatprep.subr.bf16.mxu0 0
    %261 = vmatpush1.bf16.msra.mxu0 0
    %262 = vmatprep.subr.bf16.mxu0 0
    %263 = vmatpush1.bf16.msra.mxu0 0
    %264 = vmatprep.subr.bf16.mxu0 0
    %265 = vmatpush1.bf16.msra.mxu0 0
    %266 = vmatprep.subr.bf16.mxu0 0
    %267 = vmatpush1.bf16.msra.mxu0 %v251
    %268 = vmatprep.subr.bf16.mxu0 0
    %269 = vmatpush1.bf16.msra.mxu0 %v250
    %270 = vmatprep.subr.bf16.mxu0 0
    %271 = vmatpush2.bf16.msra.mxu0 0
    %272 = vmatprep.subr.bf16.mxu0 0
    %273 = vmatpush2.bf16.msra.mxu0 0
    %274 = vmatprep.subr.bf16.mxu0 0
    %275 = vmatpush2.bf16.msra.mxu0 0
    %276 = vmatprep.subr.bf16.mxu0 0
    %277 = vmatpush2.bf16.msra.mxu0 0
    %278 = vmatprep.subr.bf16.mxu0 0
    %279 = vmatpush2.bf16.msra.mxu0 0
    %280 = vmatprep.subr.bf16.mxu0 0
    %281 = vmatpush2.bf16.msra.mxu0 0
    %282 = vmatprep.subr.bf16.mxu0 0
    %283 = vmatpush2.bf16.msra.mxu0 0
    %284 = vmatprep.subr.bf16.mxu0 0
    %285 = vmatpush2.bf16.msra.mxu0 0
    %286 = vmatprep.mubr.bf16.mxu0 0
    %287 = vmatmul.mubr.bf16.gmra.mxu0 %v195
    %v288 = vpop.f32.mrf.mxu0
    %v289 = vadd.f32 0.0, %v288
    %v290 = vpop.f32.mrf.mxu0
    %v291 = vpop.f32.mrf.mxu0
    %v292 = vpop.f32.mrf.mxu0
    %293 = vdwg.mxu0
    %v294 = vadd.f32 %v241, %v289
    %v295 = vxor.u32 %v237, 2147483648
    %v296 = vmul.f32 %v295, 1.442695
    %v297 = vpow.pop %v296
    %v298 = vadd.f32 %v297, 1.0
    %v299 = vrcp.pop %v298
    %v300 = vmul.f32 1.0, %v299
    %v301 = vtanh.pop %v237
    %v302 = vmul.f32 %v300, 0.0
    %304 = vrot.lane.b32.xlu0 %v301, 32
    %v305 = vpop.permute.xlu0 %304
    %v307 = vmul.f32 %v300, %v305
    %309 = vrot.lane.b32.xlu0 %v307, 32
    %v310 = vpop.permute.xlu0 %309
    %v312 = vadd.f32 %v302, %v310
    %v313 = vtanh.pop %v312
    %315 = vrot.lane.b32.xlu0 %v313, 32
    %v316 = vpop.permute.xlu0 %315
    %v318 = vmul.f32 %v300, %v316
    %v319 = vxor.u32 %v294, 2147483648
    %v320 = vmul.f32 %v319, 1.442695
    %v321 = vpow.pop %v320
    %v322 = vadd.f32 %v321, 1.0
    %v323 = vrcp.pop %v322
    %v324 = vmul.f32 1.0, %v323
    %v325 = vtanh.pop %v294
    %v326 = vmul.f32 %v324, 0.0
    %328 = vrot.lane.b32.xlu0 %v325, 32
    %v329 = vpop.permute.xlu0 %328
    %v331 = vmul.f32 %v324, %v329
    %333 = vrot.lane.b32.xlu0 %v331, 32
    %v334 = vpop.permute.xlu0 %333
    %v336 = vadd.f32 %v326, %v334
    %v337 = vtanh.pop %v336
    %339 = vrot.lane.b32.xlu0 %v337, 32
    %v340 = vpop.permute.xlu0 %339
    %v342 = vmul.f32 %v324, %v340
    %344 = vrot.lane.b32.xlu0 %v318, 64
    %v345 = vpop.permute.xlu0 %344
    %347 = vst.msk [vmem:[#allocation3] sm:$0xff] %vm67, %v345
    %349 = vrot.lane.b32.xlu0 %v342, 96
    %v350 = vpop.permute.xlu0 %349
    %s352 = scalar_lea.vmem [#allocation3], 56
    %vm353 = vcmask 523520
    %354 = vst.msk [vmem:[%s352] sm:$0xff] %vm353, %v350
    %s355 = smul.u32 1, 2
    %s356 = smul.addr %s355, 8
    %s357 = scalar_lea.vmem [#allocation2], %s356
    %v358 = vld [vmem:[%s357] sm:$0xff]
    %v359 = vpack.c.bf16 %v318, %v318
    %361 = vrot.lane.b32.xlu0 %v359, 64
    %v362 = vpop.permute.xlu0 %361
    %v364 = vsel %vm67, %v362, 0
    %366 = vmatprep.subr.bf16.mxu0 0
    %367 = vmatpush1.bf16.msra.mxu0 0
    %368 = vmatprep.subr.bf16.mxu0 0
    %369 = vmatpush1.bf16.msra.mxu0 0
    %370 = vmatprep.subr.bf16.mxu0 0
    %371 = vmatpush1.bf16.msra.mxu0 0
    %372 = vmatprep.subr.bf16.mxu0 0
    %373 = vmatpush1.bf16.msra.mxu0 0
    %374 = vmatprep.subr.bf16.mxu0 0
    %375 = vmatpush1.bf16.msra.mxu0 0
    %376 = vmatprep.subr.bf16.mxu0 0
    %377 = vmatpush1.bf16.msra.mxu0 0
    %378 = vmatprep.subr.bf16.mxu0 0
    %379 = vmatpush1.bf16.msra.mxu0 %v191
    %380 = vmatprep.subr.bf16.mxu0 0
    %381 = vmatpush1.bf16.msra.mxu0 %v190
    %382 = vmatprep.subr.bf16.mxu0 0
    %383 = vmatpush2.bf16.msra.mxu0 0
    %384 = vmatprep.subr.bf16.mxu0 0
    %385 = vmatpush2.bf16.msra.mxu0 0
    %386 = vmatprep.subr.bf16.mxu0 0
    %387 = vmatpush2.bf16.msra.mxu0 0
    %388 = vmatprep.subr.bf16.mxu0 0
    %389 = vmatpush2.bf16.msra.mxu0 0
    %390 = vmatprep.subr.bf16.mxu0 0
    %391 = vmatpush2.bf16.msra.mxu0 0
    %392 = vmatprep.subr.bf16.mxu0 0
    %393 = vmatpush2.bf16.msra.mxu0 0
    %394 = vmatprep.subr.bf16.mxu0 0
    %395 = vmatpush2.bf16.msra.mxu0 0
    %396 = vmatprep.subr.bf16.mxu0 0
    %397 = vmatpush2.bf16.msra.mxu0 0
    %398 = vmatprep.mubr.bf16.mxu0 0
    %399 = vmatmul.mubr.bf16.gmra.mxu0 %v364
    %v400 = vpop.f32.mrf.mxu0
    %v401 = vadd.f32 0.0, %v400
    %v402 = vpop.f32.mrf.mxu0
    %v403 = vpop.f32.mrf.mxu0
    %v404 = vpop.f32.mrf.mxu0
    %405 = vdwg.mxu0
    %v406 = vadd.f32 %v358, %v401
    %s407 = smul.u32 6, 2
    %s408 = smul.addr %s407, 8
    %s409 = scalar_lea.vmem [#allocation2], %s408
    %v410 = vld [vmem:[%s409 + $0x8] sm:$0xff]
    %v411 = vpack.c.bf16 %v342, %v342
    %413 = vrot.lane.b32.xlu0 %v411, 64
    %v414 = vpop.permute.xlu0 %413
    %v416 = vsel %vm67, %v414, 0
    %418 = vmatprep.subr.bf16.mxu0 0
    %419 = vmatpush1.bf16.msra.mxu0 0
    %420 = vmatprep.subr.bf16.mxu0 0
    %421 = vmatpush1.bf16.msra.mxu0 0
    %422 = vmatprep.subr.bf16.mxu0 0
    %423 = vmatpush1.bf16.msra.mxu0 0
    %424 = vmatprep.subr.bf16.mxu0 0
    %425 = vmatpush1.bf16.msra.mxu0 0
    %426 = vmatprep.subr.bf16.mxu0 0
    %427 = vmatpush1.bf16.msra.mxu0 0
    %428 = vmatprep.subr.bf16.mxu0 0
    %429 = vmatpush1.bf16.msra.mxu0 0
    %430 = vmatprep.subr.bf16.mxu0 0
    %431 = vmatpush1.bf16.msra.mxu0 %v251
    %432 = vmatprep.subr.bf16.mxu0 0
    %433 = vmatpush1.bf16.msra.mxu0 %v250
    %434 = vmatprep.subr.bf16.mxu0 0
    %435 = vmatpush2.bf16.msra.mxu0 0
    %436 = vmatprep.subr.bf16.mxu0 0
    %437 = vmatpush2.bf16.msra.mxu0 0
    %438 = vmatprep.subr.bf16.mxu0 0
    %439 = vmatpush2.bf16.msra.mxu0 0
    %440 = vmatprep.subr.bf16.mxu0 0
    %441 = vmatpush2.bf16.msra.mxu0 0
    %442 = vmatprep.subr.bf16.mxu0 0
    %443 = vmatpush2.bf16.msra.mxu0 0
    %444 = vmatprep.subr.bf16.mxu0 0
    %445 = vmatpush2.bf16.msra.mxu0 0
    %446 = vmatprep.subr.bf16.mxu0 0
    %447 = vmatpush2.bf16.msra.mxu0 0
    %448 = vmatprep.subr.bf16.mxu0 0
    %449 = vmatpush2.bf16.msra.mxu0 0
    %450 = vmatprep.mubr.bf16.mxu0 0
    %451 = vmatmul.mubr.bf16.gmra.mxu0 %v416
    %v452 = vpop.f32.mrf.mxu0
    %v453 = vadd.f32 0.0, %v452
    %v454 = vpop.f32.mrf.mxu0
    %v455 = vpop.f32.mrf.mxu0
    %v456 = vpop.f32.mrf.mxu0
    %457 = vdwg.mxu0
    %v458 = vadd.f32 %v410, %v453
    %v459 = vxor.u32 %v406, 2147483648
    %v460 = vmul.f32 %v459, 1.442695
    %v461 = vpow.pop %v460
    %v462 = vadd.f32 %v461, 1.0
    %v463 = vrcp.pop %v462
    %v464 = vmul.f32 1.0, %v463
    %v465 = vtanh.pop %v406
    %v466 = vmul.f32 %v464, %v312
    %468 = vrot.lane.b32.xlu0 %v465, 32
    %v469 = vpop.permute.xlu0 %468
    %v471 = vmul.f32 %v464, %v469
    %473 = vrot.lane.b32.xlu0 %v471, 32
    %v474 = vpop.permute.xlu0 %473
    %v476 = vadd.f32 %v466, %v474
    %v477 = vtanh.pop %v476
    %479 = vrot.lane.b32.xlu0 %v477, 32
    %v480 = vpop.permute.xlu0 %479
    %v482 = vmul.f32 %v464, %v480
    %v483 = vxor.u32 %v458, 2147483648
    %v484 = vmul.f32 %v483, 1.442695
    %v485 = vpow.pop %v484
    %v486 = vadd.f32 %v485, 1.0
    %v487 = vrcp.pop %v486
    %v488 = vmul.f32 1.0, %v487
    %v489 = vtanh.pop %v458
    %v490 = vmul.f32 %v488, %v336
    %492 = vrot.lane.b32.xlu0 %v489, 32
    %v493 = vpop.permute.xlu0 %492
    %v495 = vmul.f32 %v488, %v493
    %497 = vrot.lane.b32.xlu0 %v495, 32
    %v498 = vpop.permute.xlu0 %497
    %v500 = vadd.f32 %v490, %v498
    %v501 = vtanh.pop %v500
    %503 = vrot.lane.b32.xlu0 %v501, 32
    %v504 = vpop.permute.xlu0 %503
    %v506 = vmul.f32 %v488, %v504
    %508 = vrot.lane.b32.xlu0 %v482, 64
    %v509 = vpop.permute.xlu0 %508
    %s511 = scalar_lea.vmem [#allocation3], 8
    %512 = vst.msk [vmem:[%s511] sm:$0xff] %vm67, %v509
    %514 = vrot.lane.b32.xlu0 %v506, 96
    %v515 = vpop.permute.xlu0 %514
    %s517 = scalar_lea.vmem [#allocation3], 48
    %518 = vst.msk [vmem:[%s517] sm:$0xff] %vm353, %v515
    %s519 = smul.u32 2, 2
    %s520 = smul.addr %s519, 8
    %s521 = scalar_lea.vmem [#allocation2], %s520
    %v522 = vld [vmem:[%s521] sm:$0xff]
    %v523 = vpack.c.bf16 %v482, %v482
    %525 = vrot.lane.b32.xlu0 %v523, 64
    %v526 = vpop.permute.xlu0 %525
    %v528 = vsel %vm67, %v526, 0
    %530 = vmatprep.subr.bf16.mxu0 0
    %531 = vmatpush1.bf16.msra.mxu0 0
    %532 = vmatprep.subr.bf16.mxu0 0
    %533 = vmatpush1.bf16.msra.mxu0 0
    %534 = vmatprep.subr.bf16.mxu0 0
    %535 = vmatpush1.bf16.msra.mxu0 0
    %536 = vmatprep.subr.bf16.mxu0 0
    %537 = vmatpush1.bf16.msra.mxu0 0
    %538 = vmatprep.subr.bf16.mxu0 0
    %539 = vmatpush1.bf16.msra.mxu0 0
    %540 = vmatprep.subr.bf16.mxu0 0
    %541 = vmatpush1.bf16.msra.mxu0 0
    %542 = vmatprep.subr.bf16.mxu0 0
    %543 = vmatpush1.bf16.msra.mxu0 %v191
    %544 = vmatprep.subr.bf16.mxu0 0
    %545 = vmatpush1.bf16.msra.mxu0 %v190
    %546 = vmatprep.subr.bf16.mxu0 0
    %547 = vmatpush2.bf16.msra.mxu0 0
    %548 = vmatprep.subr.bf16.mxu0 0
    %549 = vmatpush2.bf16.msra.mxu0 0
    %550 = vmatprep.subr.bf16.mxu0 0
    %551 = vmatpush2.bf16.msra.mxu0 0
    %552 = vmatprep.subr.bf16.mxu0 0
    %553 = vmatpush2.bf16.msra.mxu0 0
    %554 = vmatprep.subr.bf16.mxu0 0
    %555 = vmatpush2.bf16.msra.mxu0 0
    %556 = vmatprep.subr.bf16.mxu0 0
    %557 = vmatpush2.bf16.msra.mxu0 0
    %558 = vmatprep.subr.bf16.mxu0 0
    %559 = vmatpush2.bf16.msra.mxu0 0
    %560 = vmatprep.subr.bf16.mxu0 0
    %561 = vmatpush2.bf16.msra.mxu0 0
    %562 = vmatprep.mubr.bf16.mxu0 0
    %563 = vmatmul.mubr.bf16.gmra.mxu0 %v528
    %v564 = vpop.f32.mrf.mxu0
    %v565 = vadd.f32 0.0, %v564
    %v566 = vpop.f32.mrf.mxu0
    %v567 = vpop.f32.mrf.mxu0
    %v568 = vpop.f32.mrf.mxu0
    %569 = vdwg.mxu0
    %v570 = vadd.f32 %v522, %v565
    %s571 = smul.u32 5, 2
    %s572 = smul.addr %s571, 8
    %s573 = scalar_lea.vmem [#allocation2], %s572
    %v574 = vld [vmem:[%s573 + $0x8] sm:$0xff]
    %v575 = vpack.c.bf16 %v506, %v506
    %577 = vrot.lane.b32.xlu0 %v575, 64
    %v578 = vpop.permute.xlu0 %577
    %v580 = vsel %vm67, %v578, 0
    %582 = vmatprep.subr.bf16.mxu0 0
    %583 = vmatpush1.bf16.msra.mxu0 0
    %584 = vmatprep.subr.bf16.mxu0 0
    %585 = vmatpush1.bf16.msra.mxu0 0
    %586 = vmatprep.subr.bf16.mxu0 0
    %587 = vmatpush1.bf16.msra.mxu0 0
    %588 = vmatprep.subr.bf16.mxu0 0
    %589 = vmatpush1.bf16.msra.mxu0 0
    %590 = vmatprep.subr.bf16.mxu0 0
    %591 = vmatpush1.bf16.msra.mxu0 0
    %592 = vmatprep.subr.bf16.mxu0 0
    %593 = vmatpush1.bf16.msra.mxu0 0
    %594 = vmatprep.subr.bf16.mxu0 0
    %595 = vmatpush1.bf16.msra.mxu0 %v251
    %596 = vmatprep.subr.bf16.mxu0 0
    %597 = vmatpush1.bf16.msra.mxu0 %v250
    %598 = vmatprep.subr.bf16.mxu0 0
    %599 = vmatpush2.bf16.msra.mxu0 0
    %600 = vmatprep.subr.bf16.mxu0 0
    %601 = vmatpush2.bf16.msra.mxu0 0
    %602 = vmatprep.subr.bf16.mxu0 0
    %603 = vmatpush2.bf16.msra.mxu0 0
    %604 = vmatprep.subr.bf16.mxu0 0
    %605 = vmatpush2.bf16.msra.mxu0 0
    %606 = vmatprep.subr.bf16.mxu0 0
    %607 = vmatpush2.bf16.msra.mxu0 0
    %608 = vmatprep.subr.bf16.mxu0 0
    %609 = vmatpush2.bf16.msra.mxu0 0
    %610 = vmatprep.subr.bf16.mxu0 0
    %611 = vmatpush2.bf16.msra.mxu0 0
    %612 = vmatprep.subr.bf16.mxu0 0
    %613 = vmatpush2.bf16.msra.mxu0 0
    %614 = vmatprep.mubr.bf16.mxu0 0
    %615 = vmatmul.mubr.bf16.gmra.mxu0 %v580
    %v616 = vpop.f32.mrf.mxu0
    %v617 = vadd.f32 0.0, %v616
    %v618 = vpop.f32.mrf.mxu0
    %v619 = vpop.f32.mrf.mxu0
    %v620 = vpop.f32.mrf.mxu0
    %621 = vdwg.mxu0
    %v622 = vadd.f32 %v574, %v617
    %v623 = vxor.u32 %v570, 2147483648
    %v624 = vmul.f32 %v623, 1.442695
    %v625 = vpow.pop %v624
    %v626 = vadd.f32 %v625, 1.0
    %v627 = vrcp.pop %v626
    %v628 = vmul.f32 1.0, %v627
    %v629 = vtanh.pop %v570
    %v630 = vmul.f32 %v628, %v476
    %632 = vrot.lane.b32.xlu0 %v629, 32
    %v633 = vpop.permute.xlu0 %632
    %v635 = vmul.f32 %v628, %v633
    %637 = vrot.lane.b32.xlu0 %v635, 32
    %v638 = vpop.permute.xlu0 %637
    %v640 = vadd.f32 %v630, %v638
    %v641 = vtanh.pop %v640
    %643 = vrot.lane.b32.xlu0 %v641, 32
    %v644 = vpop.permute.xlu0 %643
    %v646 = vmul.f32 %v628, %v644
    %v647 = vxor.u32 %v622, 2147483648
    %v648 = vmul.f32 %v647, 1.442695
    %v649 = vpow.pop %v648
    %v650 = vadd.f32 %v649, 1.0
    %v651 = vrcp.pop %v650
    %v652 = vmul.f32 1.0, %v651
    %v653 = vtanh.pop %v622
    %v654 = vmul.f32 %v652, %v500
    %656 = vrot.lane.b32.xlu0 %v653, 32
    %v657 = vpop.permute.xlu0 %656
    %v659 = vmul.f32 %v652, %v657
    %661 = vrot.lane.b32.xlu0 %v659, 32
    %v662 = vpop.permute.xlu0 %661
    %v664 = vadd.f32 %v654, %v662
    %v665 = vtanh.pop %v664
    %667 = vrot.lane.b32.xlu0 %v665, 32
    %v668 = vpop.permute.xlu0 %667
    %v670 = vmul.f32 %v652, %v668
    %672 = vrot.lane.b32.xlu0 %v646, 64
    %v673 = vpop.permute.xlu0 %672
    %s675 = scalar_lea.vmem [#allocation3], 16
    %676 = vst.msk [vmem:[%s675] sm:$0xff] %vm67, %v673
    %678 = vrot.lane.b32.xlu0 %v670, 96
    %v679 = vpop.permute.xlu0 %678
    %s681 = scalar_lea.vmem [#allocation3], 40
    %682 = vst.msk [vmem:[%s681] sm:$0xff] %vm353, %v679
    %s683 = smul.u32 3, 2
    %s684 = smul.addr %s683, 8
    %s685 = scalar_lea.vmem [#allocation2], %s684
    %v686 = vld [vmem:[%s685] sm:$0xff]
    %v687 = vpack.c.bf16 %v646, %v646
    %689 = vrot.lane.b32.xlu0 %v687, 64
    %v690 = vpop.permute.xlu0 %689
    %v692 = vsel %vm67, %v690, 0
    %694 = vmatprep.subr.bf16.mxu0 0
    %695 = vmatpush1.bf16.msra.mxu0 0
    %696 = vmatprep.subr.bf16.mxu0 0
    %697 = vmatpush1.bf16.msra.mxu0 0
    %698 = vmatprep.subr.bf16.mxu0 0
    %699 = vmatpush1.bf16.msra.mxu0 0
    %700 = vmatprep.subr.bf16.mxu0 0
    %701 = vmatpush1.bf16.msra.mxu0 0
    %702 = vmatprep.subr.bf16.mxu0 0
    %703 = vmatpush1.bf16.msra.mxu0 0
    %704 = vmatprep.subr.bf16.mxu0 0
    %705 = vmatpush1.bf16.msra.mxu0 0
    %706 = vmatprep.subr.bf16.mxu0 0
    %707 = vmatpush1.bf16.msra.mxu0 %v191
    %708 = vmatprep.subr.bf16.mxu0 0
    %709 = vmatpush1.bf16.msra.mxu0 %v190
    %710 = vmatprep.subr.bf16.mxu0 0
    %711 = vmatpush2.bf16.msra.mxu0 0
    %712 = vmatprep.subr.bf16.mxu0 0
    %713 = vmatpush2.bf16.msra.mxu0 0
    %714 = vmatprep.subr.bf16.mxu0 0
    %715 = vmatpush2.bf16.msra.mxu0 0
    %716 = vmatprep.subr.bf16.mxu0 0
    %717 = vmatpush2.bf16.msra.mxu0 0
    %718 = vmatprep.subr.bf16.mxu0 0
    %719 = vmatpush2.bf16.msra.mxu0 0
    %720 = vmatprep.subr.bf16.mxu0 0
    %721 = vmatpush2.bf16.msra.mxu0 0
    %722 = vmatprep.subr.bf16.mxu0 0
    %723 = vmatpush2.bf16.msra.mxu0 0
    %724 = vmatprep.subr.bf16.mxu0 0
    %725 = vmatpush2.bf16.msra.mxu0 0
    %726 = vmatprep.mubr.bf16.mxu0 0
    %727 = vmatmul.mubr.bf16.gmra.mxu0 %v692
    %v728 = vpop.f32.mrf.mxu0
    %v729 = vadd.f32 0.0, %v728
    %v730 = vpop.f32.mrf.mxu0
    %v731 = vpop.f32.mrf.mxu0
    %v732 = vpop.f32.mrf.mxu0
    %733 = vdwg.mxu0
    %v734 = vadd.f32 %v686, %v729
    %s735 = smul.u32 4, 2
    %s736 = smul.addr %s735, 8
    %s737 = scalar_lea.vmem [#allocation2], %s736
    %v738 = vld [vmem:[%s737 + $0x8] sm:$0xff]
    %v739 = vpack.c.bf16 %v670, %v670
    %741 = vrot.lane.b32.xlu0 %v739, 64
    %v742 = vpop.permute.xlu0 %741
    %v744 = vsel %vm67, %v742, 0
    %746 = vmatprep.subr.bf16.mxu0 0
    %747 = vmatpush1.bf16.msra.mxu0 0
    %748 = vmatprep.subr.bf16.mxu0 0
    %749 = vmatpush1.bf16.msra.mxu0 0
    %750 = vmatprep.subr.bf16.mxu0 0
    %751 = vmatpush1.bf16.msra.mxu0 0
    %752 = vmatprep.subr.bf16.mxu0 0
    %753 = vmatpush1.bf16.msra.mxu0 0
    %754 = vmatprep.subr.bf16.mxu0 0
    %755 = vmatpush1.bf16.msra.mxu0 0
    %756 = vmatprep.subr.bf16.mxu0 0
    %757 = vmatpush1.bf16.msra.mxu0 0
    %758 = vmatprep.subr.bf16.mxu0 0
    %759 = vmatpush1.bf16.msra.mxu0 %v251
    %760 = vmatprep.subr.bf16.mxu0 0
    %761 = vmatpush1.bf16.msra.mxu0 %v250
    %762 = vmatprep.subr.bf16.mxu0 0
    %763 = vmatpush2.bf16.msra.mxu0 0
    %764 = vmatprep.subr.bf16.mxu0 0
    %765 = vmatpush2.bf16.msra.mxu0 0
    %766 = vmatprep.subr.bf16.mxu0 0
    %767 = vmatpush2.bf16.msra.mxu0 0
    %768 = vmatprep.subr.bf16.mxu0 0
    %769 = vmatpush2.bf16.msra.mxu0 0
    %770 = vmatprep.subr.bf16.mxu0 0
    %771 = vmatpush2.bf16.msra.mxu0 0
    %772 = vmatprep.subr.bf16.mxu0 0
    %773 = vmatpush2.bf16.msra.mxu0 0
    %774 = vmatprep.subr.bf16.mxu0 0
    %775 = vmatpush2.bf16.msra.mxu0 0
    %776 = vmatprep.subr.bf16.mxu0 0
    %777 = vmatpush2.bf16.msra.mxu0 0
    %778 = vmatprep.mubr.bf16.mxu0 0
    %779 = vmatmul.mubr.bf16.gmra.mxu0 %v744
    %v780 = vpop.f32.mrf.mxu0
    %v781 = vadd.f32 0.0, %v780
    %v782 = vpop.f32.mrf.mxu0
    %v783 = vpop.f32.mrf.mxu0
    %v784 = vpop.f32.mrf.mxu0
    %785 = vdwg.mxu0
    %v786 = vadd.f32 %v738, %v781
    %v787 = vxor.u32 %v734, 2147483648
    %v788 = vmul.f32 %v787, 1.442695
    %v789 = vpow.pop %v788
    %v790 = vadd.f32 %v789, 1.0
    %v791 = vrcp.pop %v790
    %v792 = vmul.f32 1.0, %v791
    %v793 = vtanh.pop %v734
    %v794 = vmul.f32 %v792, %v640
    %796 = vrot.lane.b32.xlu0 %v793, 32
    %v797 = vpop.permute.xlu0 %796
    %v799 = vmul.f32 %v792, %v797
    %801 = vrot.lane.b32.xlu0 %v799, 32
    %v802 = vpop.permute.xlu0 %801
    %v804 = vadd.f32 %v794, %v802
    %v805 = vtanh.pop %v804
    %807 = vrot.lane.b32.xlu0 %v805, 32
    %v808 = vpop.permute.xlu0 %807
    %v810 = vmul.f32 %v792, %v808
    %v811 = vxor.u32 %v786, 2147483648
    %v812 = vmul.f32 %v811, 1.442695
    %v813 = vpow.pop %v812
    %v814 = vadd.f32 %v813, 1.0
    %v815 = vrcp.pop %v814
    %v816 = vmul.f32 1.0, %v815
    %v817 = vtanh.pop %v786
    %v818 = vmul.f32 %v816, %v664
    %820 = vrot.lane.b32.xlu0 %v817, 32
    %v821 = vpop.permute.xlu0 %820
    %v823 = vmul.f32 %v816, %v821
    %825 = vrot.lane.b32.xlu0 %v823, 32
    %v826 = vpop.permute.xlu0 %825
    %v828 = vadd.f32 %v818, %v826
    %v829 = vtanh.pop %v828
    %831 = vrot.lane.b32.xlu0 %v829, 32
    %v832 = vpop.permute.xlu0 %831
    %v834 = vmul.f32 %v816, %v832
    %836 = vrot.lane.b32.xlu0 %v810, 64
    %v837 = vpop.permute.xlu0 %836
    %s839 = scalar_lea.vmem [#allocation3], 24
    %840 = vst.msk [vmem:[%s839] sm:$0xff] %vm67, %v837
    %842 = vrot.lane.b32.xlu0 %v834, 96
    %v843 = vpop.permute.xlu0 %842
    %s845 = scalar_lea.vmem [#allocation3], 32
    %846 = vst.msk [vmem:[%s845] sm:$0xff] %vm353, %v843
    %v847 = vld [vmem:[%s737] sm:$0xff]
    %v848 = vpack.c.bf16 %v810, %v810
    %850 = vrot.lane.b32.xlu0 %v848, 64
    %v851 = vpop.permute.xlu0 %850
    %v853 = vsel %vm67, %v851, 0
    %855 = vmatprep.subr.bf16.mxu0 0
    %856 = vmatpush1.bf16.msra.mxu0 0
    %857 = vmatprep.subr.bf16.mxu0 0
    %858 = vmatpush1.bf16.msra.mxu0 0
    %859 = vmatprep.subr.bf16.mxu0 0
    %860 = vmatpush1.bf16.msra.mxu0 0
    %861 = vmatprep.subr.bf16.mxu0 0
    %862 = vmatpush1.bf16.msra.mxu0 0
    %863 = vmatprep.subr.bf16.mxu0 0
    %864 = vmatpush1.bf16.msra.mxu0 0
    %865 = vmatprep.subr.bf16.mxu0 0
    %866 = vmatpush1.bf16.msra.mxu0 0
    %867 = vmatprep.subr.bf16.mxu0 0
    %868 = vmatpush1.bf16.msra.mxu0 %v191
    %869 = vmatprep.subr.bf16.mxu0 0
    %870 = vmatpush1.bf16.msra.mxu0 %v190
    %871 = vmatprep.subr.bf16.mxu0 0
    %872 = vmatpush2.bf16.msra.mxu0 0
    %873 = vmatprep.subr.bf16.mxu0 0
    %874 = vmatpush2.bf16.msra.mxu0 0
    %875 = vmatprep.subr.bf16.mxu0 0
    %876 = vmatpush2.bf16.msra.mxu0 0
    %877 = vmatprep.subr.bf16.mxu0 0
    %878 = vmatpush2.bf16.msra.mxu0 0
    %879 = vmatprep.subr.bf16.mxu0 0
    %880 = vmatpush2.bf16.msra.mxu0 0
    %881 = vmatprep.subr.bf16.mxu0 0
    %882 = vmatpush2.bf16.msra.mxu0 0
    %883 = vmatprep.subr.bf16.mxu0 0
    %884 = vmatpush2.bf16.msra.mxu0 0
    %885 = vmatprep.subr.bf16.mxu0 0
    %886 = vmatpush2.bf16.msra.mxu0 0
    %887 = vmatprep.mubr.bf16.mxu0 0
    %888 = vmatmul.mubr.bf16.gmra.mxu0 %v853
    %v889 = vpop.f32.mrf.mxu0
    %v890 = vadd.f32 0.0, %v889
    %v891 = vpop.f32.mrf.mxu0
    %v892 = vpop.f32.mrf.mxu0
    %v893 = vpop.f32.mrf.mxu0
    %894 = vdwg.mxu0
    %v895 = vadd.f32 %v847, %v890
    %v896 = vld [vmem:[%s685 + $0x8] sm:$0xff]
    %v897 = vpack.c.bf16 %v834, %v834
    %899 = vrot.lane.b32.xlu0 %v897, 64
    %v900 = vpop.permute.xlu0 %899
    %v902 = vsel %vm67, %v900, 0
    %904 = vmatprep.subr.bf16.mxu0 0
    %905 = vmatpush1.bf16.msra.mxu0 0
    %906 = vmatprep.subr.bf16.mxu0 0
    %907 = vmatpush1.bf16.msra.mxu0 0
    %908 = vmatprep.subr.bf16.mxu0 0
    %909 = vmatpush1.bf16.msra.mxu0 0
    %910 = vmatprep.subr.bf16.mxu0 0
    %911 = vmatpush1.bf16.msra.mxu0 0
    %912 = vmatprep.subr.bf16.mxu0 0
    %913 = vmatpush1.bf16.msra.mxu0 0
    %914 = vmatprep.subr.bf16.mxu0 0
    %915 = vmatpush1.bf16.msra.mxu0 0
    %916 = vmatprep.subr.bf16.mxu0 0
    %917 = vmatpush1.bf16.msra.mxu0 %v251
    %918 = vmatprep.subr.bf16.mxu0 0
    %919 = vmatpush1.bf16.msra.mxu0 %v250
    %920 = vmatprep.subr.bf16.mxu0 0
    %921 = vmatpush2.bf16.msra.mxu0 0
    %922 = vmatprep.subr.bf16.mxu0 0
    %923 = vmatpush2.bf16.msra.mxu0 0
    %924 = vmatprep.subr.bf16.mxu0 0
    %925 = vmatpush2.bf16.msra.mxu0 0
    %926 = vmatprep.subr.bf16.mxu0 0
    %927 = vmatpush2.bf16.msra.mxu0 0
    %928 = vmatprep.subr.bf16.mxu0 0
    %929 = vmatpush2.bf16.msra.mxu0 0
    %930 = vmatprep.subr.bf16.mxu0 0
    %931 = vmatpush2.bf16.msra.mxu0 0
    %932 = vmatprep.subr.bf16.mxu0 0
    %933 = vmatpush2.bf16.msra.mxu0 0
    %934 = vmatprep.subr.bf16.mxu0 0
    %935 = vmatpush2.bf16.msra.mxu0 0
    %936 = vmatprep.mubr.bf16.mxu0 0
    %937 = vmatmul.mubr.bf16.gmra.mxu0 %v902
    %v938 = vpop.f32.mrf.mxu0
    %v939 = vadd.f32 0.0, %v938
    %v940 = vpop.f32.mrf.mxu0
    %v941 = vpop.f32.mrf.mxu0
    %v942 = vpop.f32.mrf.mxu0
    %943 = vdwg.mxu0
    %v944 = vadd.f32 %v896, %v939
    %v945 = vxor.u32 %v895, 2147483648
    %v946 = vmul.f32 %v945, 1.442695
    %v947 = vpow.pop %v946
    %v948 = vadd.f32 %v947, 1.0
    %v949 = vrcp.pop %v948
    %v950 = vmul.f32 1.0, %v949
    %v951 = vtanh.pop %v895
    %v952 = vmul.f32 %v950, %v804
    %954 = vrot.lane.b32.xlu0 %v951, 32
    %v955 = vpop.permute.xlu0 %954
    %v957 = vmul.f32 %v950, %v955
    %959 = vrot.lane.b32.xlu0 %v957, 32
    %v960 = vpop.permute.xlu0 %959
    %v962 = vadd.f32 %v952, %v960
    %v963 = vtanh.pop %v962
    %965 = vrot.lane.b32.xlu0 %v963, 32
    %v966 = vpop.permute.xlu0 %965
    %v968 = vmul.f32 %v950, %v966
    %v969 = vxor.u32 %v944, 2147483648
    %v970 = vmul.f32 %v969, 1.442695
    %v971 = vpow.pop %v970
    %v972 = vadd.f32 %v971, 1.0
    %v973 = vrcp.pop %v972
    %v974 = vmul.f32 1.0, %v973
    %v975 = vtanh.pop %v944
    %v976 = vmul.f32 %v974, %v828
    %978 = vrot.lane.b32.xlu0 %v975, 32
    %v979 = vpop.permute.xlu0 %978
    %v981 = vmul.f32 %v974, %v979
    %983 = vrot.lane.b32.xlu0 %v981, 32
    %v984 = vpop.permute.xlu0 %983
    %v986 = vadd.f32 %v976, %v984
    %v987 = vtanh.pop %v986
    %989 = vrot.lane.b32.xlu0 %v987, 32
    %v990 = vpop.permute.xlu0 %989
    %v992 = vmul.f32 %v974, %v990
    %994 = vrot.lane.b32.xlu0 %v968, 64
    %v995 = vpop.permute.xlu0 %994
    %997 = vst.msk [vmem:[%s845] sm:$0xff] %vm67, %v995
    %999 = vrot.lane.b32.xlu0 %v992, 96
    %v1000 = vpop.permute.xlu0 %999
    %1002 = vst.msk [vmem:[%s839] sm:$0xff] %vm353, %v1000
    %v1003 = vld [vmem:[%s573] sm:$0xff]
    %v1004 = vpack.c.bf16 %v968, %v968
    %1006 = vrot.lane.b32.xlu0 %v1004, 64
    %v1007 = vpop.permute.xlu0 %1006
    %v1009 = vsel %vm67, %v1007, 0
    %1011 = vmatprep.subr.bf16.mxu0 0
    %1012 = vmatpush1.bf16.msra.mxu0 0
    %1013 = vmatprep.subr.bf16.mxu0 0
    %1014 = vmatpush1.bf16.msra.mxu0 0
    %1015 = vmatprep.subr.bf16.mxu0 0
    %1016 = vmatpush1.bf16.msra.mxu0 0
    %1017 = vmatprep.subr.bf16.mxu0 0
    %1018 = vmatpush1.bf16.msra.mxu0 0
    %1019 = vmatprep.subr.bf16.mxu0 0
    %1020 = vmatpush1.bf16.msra.mxu0 0
    %1021 = vmatprep.subr.bf16.mxu0 0
    %1022 = vmatpush1.bf16.msra.mxu0 0
    %1023 = vmatprep.subr.bf16.mxu0 0
    %1024 = vmatpush1.bf16.msra.mxu0 %v191
    %1025 = vmatprep.subr.bf16.mxu0 0
    %1026 = vmatpush1.bf16.msra.mxu0 %v190
    %1027 = vmatprep.subr.bf16.mxu0 0
    %1028 = vmatpush2.bf16.msra.mxu0 0
    %1029 = vmatprep.subr.bf16.mxu0 0
    %1030 = vmatpush2.bf16.msra.mxu0 0
    %1031 = vmatprep.subr.bf16.mxu0 0
    %1032 = vmatpush2.bf16.msra.mxu0 0
    %1033 = vmatprep.subr.bf16.mxu0 0
    %1034 = vmatpush2.bf16.msra.mxu0 0
    %1035 = vmatprep.subr.bf16.mxu0 0
    %1036 = vmatpush2.bf16.msra.mxu0 0
    %1037 = vmatprep.subr.bf16.mxu0 0
    %1038 = vmatpush2.bf16.msra.mxu0 0
    %1039 = vmatprep.subr.bf16.mxu0 0
    %1040 = vmatpush2.bf16.msra.mxu0 0
    %1041 = vmatprep.subr.bf16.mxu0 0
    %1042 = vmatpush2.bf16.msra.mxu0 0
    %1043 = vmatprep.mubr.bf16.mxu0 0
    %1044 = vmatmul.mubr.bf16.gmra.mxu0 %v1009
    %v1045 = vpop.f32.mrf.mxu0
    %v1046 = vadd.f32 0.0, %v1045
    %v1047 = vpop.f32.mrf.mxu0
    %v1048 = vpop.f32.mrf.mxu0
    %v1049 = vpop.f32.mrf.mxu0
    %1050 = vdwg.mxu0
    %v1051 = vadd.f32 %v1003, %v1046
    %v1052 = vld [vmem:[%s521 + $0x8] sm:$0xff]
    %v1053 = vpack.c.bf16 %v992, %v992
    %1055 = vrot.lane.b32.xlu0 %v1053, 64
    %v1056 = vpop.permute.xlu0 %1055
    %v1058 = vsel %vm67, %v1056, 0
    %1060 = vmatprep.subr.bf16.mxu0 0
    %1061 = vmatpush1.bf16.msra.mxu0 0
    %1062 = vmatprep.subr.bf16.mxu0 0
    %1063 = vmatpush1.bf16.msra.mxu0 0
    %1064 = vmatprep.subr.bf16.mxu0 0
    %1065 = vmatpush1.bf16.msra.mxu0 0
    %1066 = vmatprep.subr.bf16.mxu0 0
    %1067 = vmatpush1.bf16.msra.mxu0 0
    %1068 = vmatprep.subr.bf16.mxu0 0
    %1069 = vmatpush1.bf16.msra.mxu0 0
    %1070 = vmatprep.subr.bf16.mxu0 0
    %1071 = vmatpush1.bf16.msra.mxu0 0
    %1072 = vmatprep.subr.bf16.mxu0 0
    %1073 = vmatpush1.bf16.msra.mxu0 %v251
    %1074 = vmatprep.subr.bf16.mxu0 0
    %1075 = vmatpush1.bf16.msra.mxu0 %v250
    %1076 = vmatprep.subr.bf16.mxu0 0
    %1077 = vmatpush2.bf16.msra.mxu0 0
    %1078 = vmatprep.subr.bf16.mxu0 0
    %1079 = vmatpush2.bf16.msra.mxu0 0
    %1080 = vmatprep.subr.bf16.mxu0 0
    %1081 = vmatpush2.bf16.msra.mxu0 0
    %1082 = vmatprep.subr.bf16.mxu0 0
    %1083 = vmatpush2.bf16.msra.mxu0 0
    %1084 = vmatprep.subr.bf16.mxu0 0
    %1085 = vmatpush2.bf16.msra.mxu0 0
    %1086 = vmatprep.subr.bf16.mxu0 0
    %1087 = vmatpush2.bf16.msra.mxu0 0
    %1088 = vmatprep.subr.bf16.mxu0 0
    %1089 = vmatpush2.bf16.msra.mxu0 0
    %1090 = vmatprep.subr.bf16.mxu0 0
    %1091 = vmatpush2.bf16.msra.mxu0 0
    %1092 = vmatprep.mubr.bf16.mxu0 0
    %1093 = vmatmul.mubr.bf16.gmra.mxu0 %v1058
    %v1094 = vpop.f32.mrf.mxu0
    %v1095 = vadd.f32 0.0, %v1094
    %v1096 = vpop.f32.mrf.mxu0
    %v1097 = vpop.f32.mrf.mxu0
    %v1098 = vpop.f32.mrf.mxu0
    %1099 = vdwg.mxu0
    %v1100 = vadd.f32 %v1052, %v1095
    %v1101 = vxor.u32 %v1051, 2147483648
    %v1102 = vmul.f32 %v1101, 1.442695
    %v1103 = vpow.pop %v1102
    %v1104 = vadd.f32 %v1103, 1.0
    %v1105 = vrcp.pop %v1104
    %v1106 = vmul.f32 1.0, %v1105
    %v1107 = vtanh.pop %v1051
    %v1108 = vmul.f32 %v1106, %v962
    %1110 = vrot.lane.b32.xlu0 %v1107, 32
    %v1111 = vpop.permute.xlu0 %1110
    %v1113 = vmul.f32 %v1106, %v1111
    %1115 = vrot.lane.b32.xlu0 %v1113, 32
    %v1116 = vpop.permute.xlu0 %1115
    %v1118 = vadd.f32 %v1108, %v1116
    %v1119 = vtanh.pop %v1118
    %1121 = vrot.lane.b32.xlu0 %v1119, 32
    %v1122 = vpop.permute.xlu0 %1121
    %v1124 = vmul.f32 %v1106, %v1122
    %v1125 = vxor.u32 %v1100, 2147483648
    %v1126 = vmul.f32 %v1125, 1.442695
    %v1127 = vpow.pop %v1126
    %v1128 = vadd.f32 %v1127, 1.0
    %v1129 = vrcp.pop %v1128
    %v1130 = vmul.f32 1.0, %v1129
    %v1131 = vtanh.pop %v1100
    %v1132 = vmul.f32 %v1130, %v986
    %1134 = vrot.lane.b32.xlu0 %v1131, 32
    %v1135 = vpop.permute.xlu0 %1134
    %v1137 = vmul.f32 %v1130, %v1135
    %1139 = vrot.lane.b32.xlu0 %v1137, 32
    %v1140 = vpop.permute.xlu0 %1139
    %v1142 = vadd.f32 %v1132, %v1140
    %v1143 = vtanh.pop %v1142
    %1145 = vrot.lane.b32.xlu0 %v1143, 32
    %v1146 = vpop.permute.xlu0 %1145
    %v1148 = vmul.f32 %v1130, %v1146
    %1150 = vrot.lane.b32.xlu0 %v1124, 64
    %v1151 = vpop.permute.xlu0 %1150
    %1153 = vst.msk [vmem:[%s681] sm:$0xff] %vm67, %v1151
    %1155 = vrot.lane.b32.xlu0 %v1148, 96
    %v1156 = vpop.permute.xlu0 %1155
    %1158 = vst.msk [vmem:[%s675] sm:$0xff] %vm353, %v1156
    %v1159 = vld [vmem:[%s409] sm:$0xff]
    %v1160 = vpack.c.bf16 %v1124, %v1124
    %1162 = vrot.lane.b32.xlu0 %v1160, 64
    %v1163 = vpop.permute.xlu0 %1162
    %v1165 = vsel %vm67, %v1163, 0
    %1167 = vmatprep.subr.bf16.mxu0 0
    %1168 = vmatpush1.bf16.msra.mxu0 0
    %1169 = vmatprep.subr.bf16.mxu0 0
    %1170 = vmatpush1.bf16.msra.mxu0 0
    %1171 = vmatprep.subr.bf16.mxu0 0
    %1172 = vmatpush1.bf16.msra.mxu0 0
    %1173 = vmatprep.subr.bf16.mxu0 0
    %1174 = vmatpush1.bf16.msra.mxu0 0
    %1175 = vmatprep.subr.bf16.mxu0 0
    %1176 = vmatpush1.bf16.msra.mxu0 0
    %1177 = vmatprep.subr.bf16.mxu0 0
    %1178 = vmatpush1.bf16.msra.mxu0 0
    %1179 = vmatprep.subr.bf16.mxu0 0
    %1180 = vmatpush1.bf16.msra.mxu0 %v191
    %1181 = vmatprep.subr.bf16.mxu0 0
    %1182 = vmatpush1.bf16.msra.mxu0 %v190
    %1183 = vmatprep.subr.bf16.mxu0 0
    %1184 = vmatpush2.bf16.msra.mxu0 0
    %1185 = vmatprep.subr.bf16.mxu0 0
    %1186 = vmatpush2.bf16.msra.mxu0 0
    %1187 = vmatprep.subr.bf16.mxu0 0
    %1188 = vmatpush2.bf16.msra.mxu0 0
    %1189 = vmatprep.subr.bf16.mxu0 0
    %1190 = vmatpush2.bf16.msra.mxu0 0
    %1191 = vmatprep.subr.bf16.mxu0 0
    %1192 = vmatpush2.bf16.msra.mxu0 0
    %1193 = vmatprep.subr.bf16.mxu0 0
    %1194 = vmatpush2.bf16.msra.mxu0 0
    %1195 = vmatprep.subr.bf16.mxu0 0
    %1196 = vmatpush2.bf16.msra.mxu0 0
    %1197 = vmatprep.subr.bf16.mxu0 0
    %1198 = vmatpush2.bf16.msra.mxu0 0
    %1199 = vmatprep.mubr.bf16.mxu0 0
    %1200 = vmatmul.mubr.bf16.gmra.mxu0 %v1165
    %v1201 = vpop.f32.mrf.mxu0
    %v1202 = vadd.f32 0.0, %v1201
    %v1203 = vpop.f32.mrf.mxu0
    %v1204 = vpop.f32.mrf.mxu0
    %v1205 = vpop.f32.mrf.mxu0
    %1206 = vdwg.mxu0
    %v1207 = vadd.f32 %v1159, %v1202
    %v1208 = vld [vmem:[%s357 + $0x8] sm:$0xff]
    %v1209 = vpack.c.bf16 %v1148, %v1148
    %1211 = vrot.lane.b32.xlu0 %v1209, 64
    %v1212 = vpop.permute.xlu0 %1211
    %v1214 = vsel %vm67, %v1212, 0
    %1216 = vmatprep.subr.bf16.mxu0 0
    %1217 = vmatpush1.bf16.msra.mxu0 0
    %1218 = vmatprep.subr.bf16.mxu0 0
    %1219 = vmatpush1.bf16.msra.mxu0 0
    %1220 = vmatprep.subr.bf16.mxu0 0
    %1221 = vmatpush1.bf16.msra.mxu0 0
    %1222 = vmatprep.subr.bf16.mxu0 0
    %1223 = vmatpush1.bf16.msra.mxu0 0
    %1224 = vmatprep.subr.bf16.mxu0 0
    %1225 = vmatpush1.bf16.msra.mxu0 0
    %1226 = vmatprep.subr.bf16.mxu0 0
    %1227 = vmatpush1.bf16.msra.mxu0 0
    %1228 = vmatprep.subr.bf16.mxu0 0
    %1229 = vmatpush1.bf16.msra.mxu0 %v251
    %1230 = vmatprep.subr.bf16.mxu0 0
    %1231 = vmatpush1.bf16.msra.mxu0 %v250
    %1232 = vmatprep.subr.bf16.mxu0 0
    %1233 = vmatpush2.bf16.msra.mxu0 0
    %1234 = vmatprep.subr.bf16.mxu0 0
    %1235 = vmatpush2.bf16.msra.mxu0 0
    %1236 = vmatprep.subr.bf16.mxu0 0
    %1237 = vmatpush2.bf16.msra.mxu0 0
    %1238 = vmatprep.subr.bf16.mxu0 0
    %1239 = vmatpush2.bf16.msra.mxu0 0
    %1240 = vmatprep.subr.bf16.mxu0 0
    %1241 = vmatpush2.bf16.msra.mxu0 0
    %1242 = vmatprep.subr.bf16.mxu0 0
    %1243 = vmatpush2.bf16.msra.mxu0 0
    %1244 = vmatprep.subr.bf16.mxu0 0
    %1245 = vmatpush2.bf16.msra.mxu0 0
    %1246 = vmatprep.subr.bf16.mxu0 0
    %1247 = vmatpush2.bf16.msra.mxu0 0
    %1248 = vmatprep.mubr.bf16.mxu0 0
    %1249 = vmatmul.mubr.bf16.gmra.mxu0 %v1214
    %v1250 = vpop.f32.mrf.mxu0
    %v1251 = vadd.f32 0.0, %v1250
    %v1252 = vpop.f32.mrf.mxu0
    %v1253 = vpop.f32.mrf.mxu0
    %v1254 = vpop.f32.mrf.mxu0
    %1255 = vdwg.mxu0
    %v1256 = vadd.f32 %v1208, %v1251
    %v1257 = vxor.u32 %v1207, 2147483648
    %v1258 = vmul.f32 %v1257, 1.442695
    %v1259 = vpow.pop %v1258
    %v1260 = vadd.f32 %v1259, 1.0
    %v1261 = vrcp.pop %v1260
    %v1262 = vmul.f32 1.0, %v1261
    %v1263 = vtanh.pop %v1207
    %v1264 = vmul.f32 %v1262, %v1118
    %1266 = vrot.lane.b32.xlu0 %v1263, 32
    %v1267 = vpop.permute.xlu0 %1266
    %v1269 = vmul.f32 %v1262, %v1267
    %1271 = vrot.lane.b32.xlu0 %v1269, 32
    %v1272 = vpop.permute.xlu0 %1271
    %v1274 = vadd.f32 %v1264, %v1272
    %v1275 = vtanh.pop %v1274
    %1277 = vrot.lane.b32.xlu0 %v1275, 32
    %v1278 = vpop.permute.xlu0 %1277
    %v1280 = vmul.f32 %v1262, %v1278
    %v1281 = vxor.u32 %v1256, 2147483648
    %v1282 = vmul.f32 %v1281, 1.442695
    %v1283 = vpow.pop %v1282
    %v1284 = vadd.f32 %v1283, 1.0
    %v1285 = vrcp.pop %v1284
    %v1286 = vmul.f32 1.0, %v1285
    %v1287 = vtanh.pop %v1256
    %v1288 = vmul.f32 %v1286, %v1142
    %1290 = vrot.lane.b32.xlu0 %v1287, 32
    %v1291 = vpop.permute.xlu0 %1290
    %v1293 = vmul.f32 %v1286, %v1291
    %1295 = vrot.lane.b32.xlu0 %v1293, 32
    %v1296 = vpop.permute.xlu0 %1295
    %v1298 = vadd.f32 %v1288, %v1296
    %v1299 = vtanh.pop %v1298
    %1301 = vrot.lane.b32.xlu0 %v1299, 32
    %v1302 = vpop.permute.xlu0 %1301
    %v1304 = vmul.f32 %v1286, %v1302
    %1306 = vrot.lane.b32.xlu0 %v1280, 64
    %v1307 = vpop.permute.xlu0 %1306
    %1309 = vst.msk [vmem:[%s517] sm:$0xff] %vm67, %v1307
    %1311 = vrot.lane.b32.xlu0 %v1304, 96
    %v1312 = vpop.permute.xlu0 %1311
    %1314 = vst.msk [vmem:[%s511] sm:$0xff] %vm353, %v1312
    %v1315 = vld [vmem:[%s240] sm:$0xff]
    %v1316 = vpack.c.bf16 %v1280, %v1280
    %1318 = vrot.lane.b32.xlu0 %v1316, 64
    %v1319 = vpop.permute.xlu0 %1318
    %v1321 = vsel %vm67, %v1319, 0
    %1323 = vmatprep.subr.bf16.mxu0 0
    %1324 = vmatpush1.bf16.msra.mxu0 0
    %1325 = vmatprep.subr.bf16.mxu0 0
    %1326 = vmatpush1.bf16.msra.mxu0 0
    %1327 = vmatprep.subr.bf16.mxu0 0
    %1328 = vmatpush1.bf16.msra.mxu0 0
    %1329 = vmatprep.subr.bf16.mxu0 0
    %1330 = vmatpush1.bf16.msra.mxu0 0
    %1331 = vmatprep.subr.bf16.mxu0 0
    %1332 = vmatpush1.bf16.msra.mxu0 0
    %1333 = vmatprep.subr.bf16.mxu0 0
    %1334 = vmatpush1.bf16.msra.mxu0 0
    %1335 = vmatprep.subr.bf16.mxu0 0
    %1336 = vmatpush1.bf16.msra.mxu0 %v191
    %1337 = vmatprep.subr.bf16.mxu0 0
    %1338 = vmatpush1.bf16.msra.mxu0 %v190
    %1339 = vmatprep.subr.bf16.mxu0 0
    %1340 = vmatpush2.bf16.msra.mxu0 0
    %1341 = vmatprep.subr.bf16.mxu0 0
    %1342 = vmatpush2.bf16.msra.mxu0 0
    %1343 = vmatprep.subr.bf16.mxu0 0
    %1344 = vmatpush2.bf16.msra.mxu0 0
    %1345 = vmatprep.subr.bf16.mxu0 0
    %1346 = vmatpush2.bf16.msra.mxu0 0
    %1347 = vmatprep.subr.bf16.mxu0 0
    %1348 = vmatpush2.bf16.msra.mxu0 0
    %1349 = vmatprep.subr.bf16.mxu0 0
    %1350 = vmatpush2.bf16.msra.mxu0 0
    %1351 = vmatprep.subr.bf16.mxu0 0
    %1352 = vmatpush2.bf16.msra.mxu0 0
    %1353 = vmatprep.subr.bf16.mxu0 0
    %1354 = vmatpush2.bf16.msra.mxu0 0
    %1355 = vmatprep.mubr.bf16.mxu0 0
    %1356 = vmatmul.mubr.bf16.gmra.mxu0 %v1321
    %v1357 = vpop.f32.mrf.mxu0
    %v1358 = vadd.f32 0.0, %v1357
    %v1359 = vpop.f32.mrf.mxu0
    %v1360 = vpop.f32.mrf.mxu0
    %v1361 = vpop.f32.mrf.mxu0
    %1362 = vdwg.mxu0
    %v1363 = vadd.f32 %v1315, %v1358
    %v1364 = vld [vmem:[%s180 + $0x8] sm:$0xff]
    %v1365 = vpack.c.bf16 %v1304, %v1304
    %1367 = vrot.lane.b32.xlu0 %v1365, 64
    %v1368 = vpop.permute.xlu0 %1367
    %v1370 = vsel %vm67, %v1368, 0
    %1372 = vmatprep.subr.bf16.mxu0 0
    %1373 = vmatpush1.bf16.msra.mxu0 0
    %1374 = vmatprep.subr.bf16.mxu0 0
    %1375 = vmatpush1.bf16.msra.mxu0 0
    %1376 = vmatprep.subr.bf16.mxu0 0
    %1377 = vmatpush1.bf16.msra.mxu0 0
    %1378 = vmatprep.subr.bf16.mxu0 0
    %1379 = vmatpush1.bf16.msra.mxu0 0
    %1380 = vmatprep.subr.bf16.mxu0 0
    %1381 = vmatpush1.bf16.msra.mxu0 0
    %1382 = vmatprep.subr.bf16.mxu0 0
    %1383 = vmatpush1.bf16.msra.mxu0 0
    %1384 = vmatprep.subr.bf16.mxu0 0
    %1385 = vmatpush1.bf16.msra.mxu0 %v251
    %1386 = vmatprep.subr.bf16.mxu0 0
    %1387 = vmatpush1.bf16.msra.mxu0 %v250
    %1388 = vmatprep.subr.bf16.mxu0 0
    %1389 = vmatpush2.bf16.msra.mxu0 0
    %1390 = vmatprep.subr.bf16.mxu0 0
    %1391 = vmatpush2.bf16.msra.mxu0 0
    %1392 = vmatprep.subr.bf16.mxu0 0
    %1393 = vmatpush2.bf16.msra.mxu0 0
    %1394 = vmatprep.subr.bf16.mxu0 0
    %1395 = vmatpush2.bf16.msra.mxu0 0
    %1396 = vmatprep.subr.bf16.mxu0 0
    %1397 = vmatpush2.bf16.msra.mxu0 0
    %1398 = vmatprep.subr.bf16.mxu0 0
    %1399 = vmatpush2.bf16.msra.mxu0 0
    %1400 = vmatprep.subr.bf16.mxu0 0
    %1401 = vmatpush2.bf16.msra.mxu0 0
    %1402 = vmatprep.subr.bf16.mxu0 0
    %1403 = vmatpush2.bf16.msra.mxu0 0
    %1404 = vmatprep.mubr.bf16.mxu0 0
    %1405 = vmatmul.mubr.bf16.gmra.mxu0 %v1370
    %v1406 = vpop.f32.mrf.mxu0
    %v1407 = vadd.f32 0.0, %v1406
    %v1408 = vpop.f32.mrf.mxu0
    %v1409 = vpop.f32.mrf.mxu0
    %v1410 = vpop.f32.mrf.mxu0
    %1411 = vdwg.mxu0
    %v1412 = vadd.f32 %v1364, %v1407
    %v1413 = vxor.u32 %v1363, 2147483648
    %v1414 = vmul.f32 %v1413, 1.442695
    %v1415 = vpow.pop %v1414
    %v1416 = vadd.f32 %v1415, 1.0
    %v1417 = vrcp.pop %v1416
    %v1418 = vmul.f32 1.0, %v1417
    %v1419 = vtanh.pop %v1363
    %v1420 = vmul.f32 %v1418, %v1274
    %1422 = vrot.lane.b32.xlu0 %v1419, 32
    %v1423 = vpop.permute.xlu0 %1422
    %v1425 = vmul.f32 %v1418, %v1423
    %1427 = vrot.lane.b32.xlu0 %v1425, 32
    %v1428 = vpop.permute.xlu0 %1427
    %v1430 = vadd.f32 %v1420, %v1428
    %v1431 = vtanh.pop %v1430
    %1433 = vrot.lane.b32.xlu0 %v1431, 32
    %v1434 = vpop.permute.xlu0 %1433
    %v1436 = vmul.f32 %v1418, %v1434
    %v1437 = vxor.u32 %v1412, 2147483648
    %v1438 = vmul.f32 %v1437, 1.442695
    %v1439 = vpow.pop %v1438
    %v1440 = vadd.f32 %v1439, 1.0
    %v1441 = vrcp.pop %v1440
    %v1442 = vmul.f32 1.0, %v1441
    %v1443 = vtanh.pop %v1412
    %v1444 = vmul.f32 %v1442, %v1298
    %1446 = vrot.lane.b32.xlu0 %v1443, 32
    %v1447 = vpop.permute.xlu0 %1446
    %v1449 = vmul.f32 %v1442, %v1447
    %1451 = vrot.lane.b32.xlu0 %v1449, 32
    %v1452 = vpop.permute.xlu0 %1451
    %v1454 = vadd.f32 %v1444, %v1452
    %v1455 = vtanh.pop %v1454
    %1457 = vrot.lane.b32.xlu0 %v1455, 32
    %v1458 = vpop.permute.xlu0 %1457
    %v1460 = vmul.f32 %v1442, %v1458
    %1462 = vrot.lane.b32.xlu0 %v1436, 64
    %v1463 = vpop.permute.xlu0 %1462
    %1465 = vst.msk [vmem:[%s352] sm:$0xff] %vm67, %v1463
    %1467 = vrot.lane.b32.xlu0 %v1460, 96
    %v1468 = vpop.permute.xlu0 %1467
    %1470 = vst.msk [vmem:[#allocation3] sm:$0xff] %vm353, %v1468
    // Predicated region
    $region18: #{tpu_custom_call.1} parent=1 // pred_check
      _
    $region19: #{tpu_custom_call.1} parent=1 // pred_check_branch
      %1472 = sbr.rel (0) target = $region21
    $region20: #{tpu_custom_call.1} parent=1 // pred_region
      %s1474 = ssub.s32 1024, 1024
      %1475 = vsyncadd [#allocation4], %s1474
      %s1476 = sshll.u32 [#allocation3], 4
      %s1477 = int_to_ptr.vmem [resolvable:$true] %s1476
      %1482 = dma.vmem_to_hbm [thread:$0]  %s1477, 1024, %s4, [#allocation4], 128, 128, 8
    $region21: #{tpu_custom_call.1} parent=1 // pred_fallthru
      _
    // Predicated region
    $region22: #{tpu_custom_call.1} parent=1 // pred_check
      _
    $region23: #{tpu_custom_call.1} parent=1 // pred_check_branch
      %1484 = sbr.rel (0) target = $region25
    $region24: #{tpu_custom_call.1} parent=1 // pred_region
      %1485 = dma.done [#allocation4], 1024
    $region25: #{tpu_custom_call.1} parent=1 // pred_fallthru
      _
    %1486 = vsyncpa [#allocation4], 1

</llo_original>
